<compile_context>
chip_gen: v5e
topology: v5e:2x2
jax: 0.10.0
libtpu: 0.0.40
codegen_flags: <defaults>
</compile_context>

<pallas_src>
import functools
import math

import jax
import jax.numpy as jnp
from jax import lax
from jax.experimental import pallas as pl
from jax.experimental.pallas import tpu as pltpu


_BF16_SUBLANE = 16   # bf16 packs 16 sublane rows per (16, 128) vreg tile
_LANE = 128


def _round_up(x, m):
    return ((x + m - 1) // m) * m


# ----------------------------------------------------------------------------
# Pallas kernel: full num_layers LSTM over the sequence, per-layer [h, c]
# packing (PyTorch ordering h0,c0,h1,c1,...), tanh, and the final FC.
# One grid step == one batch tile of Bt rows.
# ----------------------------------------------------------------------------
def _qst_encoder_kernel(num_layers, hidden_size, seq_len, batch_tile,
                        x_ref, *args):
    H = hidden_size
    S = seq_len
    Bt = batch_tile

    n_layer_refs = 3 * num_layers
    layer_refs = args[:n_layer_refs]
    wfc_ref = args[n_layer_refs]
    bfc_ref = args[n_layer_refs + 1]
    out_ref = args[n_layer_refs + 2]
    proj_buf = args[n_layer_refs + 3]   # VMEM (S*Bt, 4H) bf16: hoisted x@W_ih + b
    seq_buf = args[n_layer_refs + 4]    # VMEM (S*Bt, H)  bf16: layer l -> l+1
    feat_buf = args[n_layer_refs + 5]   # VMEM (Bt, 2*L*H) f32: [h0,c0,h1,c1,...]

    def gates_to_hc(gates, h_prev, c_prev):
        # Wrapper permutes gate columns to [i, f, o, g] and folds a x2 into the
        # g columns, so ONE full-width (Bt, 4H) sigmoid covers all gates and
        # tanh(g_pre) = 2*sigmoid(2*g_pre) - 1.
        sig = jax.nn.sigmoid(gates)
        i_g = sig[:, 0:H]
        f_g = sig[:, H:2 * H]
        o_g = sig[:, 2 * H:3 * H]
        g_g = 2.0 * sig[:, 3 * H:4 * H] - 1.0
        if c_prev is None:                       # t == 0: h0 = c0 = 0
            c_new = i_g * g_g
        else:
            c_new = f_g * c_prev + i_g * g_g
        h_new = o_g * jnp.tanh(c_new)
        return h_new, c_new

    for l in range(num_layers):
        wih = layer_refs[3 * l][...]             # bf16 (in_feat, 4H)
        whh = layer_refs[3 * l + 1][...]         # bf16 (H, 4H)
        bias = layer_refs[3 * l + 2][...]        # f32  (1, 4H)
        last = (l == num_layers - 1)

        # ---- hoisted input projection: one (S*Bt, in) @ (in, 4H) matmul -----
        # TODO(synk): double-buffer next layer's W_ih/W_hh from pl.ANY with
        # pltpu.make_async_copy to hide the weight DMA under the recurrence
        # (matters most on v5e's ~0.8 TB/s HBM).
        if l == 0:
            xin = jnp.tanh(x_ref[...])           # bf16 (S*Bt, E), tanh(word2vec)
        else:
            xin = seq_buf[...]                   # bf16 (S*Bt, H)
        proj = jnp.dot(xin, wih, preferred_element_type=jnp.float32)
        proj_buf[...] = (proj + bias).astype(jnp.bfloat16)

        # ---- t = 0: zero state => no h @ W_hh on the critical path ----------
        g0 = proj_buf[pl.ds(0, Bt), :].astype(jnp.float32)
        h, c = gates_to_hc(g0, None, None)
        if not last:
            seq_buf[pl.ds(0, Bt), :] = h.astype(jnp.bfloat16)

        # ---- t = 1 .. S-1: only h @ W_hh remains inside the recurrence ------
        # TODO(synk): make W_hh weight-stationary on the MXU
        # (pltpu.matmul_push_rhs / matmul_acc_lhs / matmul_pop) to drop the
        # per-step RHS push from the serial critical path.
        def step(t, carry, whh=whh, last=last):
            h, c = carry
            row = pl.multiple_of(t * Bt, Bt)     # Bt-aligned (>= bf16 tile)
            gates = (proj_buf[pl.ds(row, Bt), :].astype(jnp.float32)
                     + jnp.dot(h.astype(jnp.bfloat16), whh,
                               preferred_element_type=jnp.float32))
            h_new, c_new = gates_to_hc(gates, h, c)
            if not last:
                # Last layer's per-timestep outputs are never read: skip store.
                seq_buf[pl.ds(row, Bt), :] = h_new.astype(jnp.bfloat16)
            return (h_new, c_new)

        unroll = True if S <= 16 else 4
        h, c = lax.fori_loop(1, S, step, (h, c), unroll=unroll)

        # PyTorch torch.cat((hidden, cell), 2).transpose(0,1).reshape(B, -1)
        # ordering per batch row: [h_l0, c_l0, h_l1, c_l1, ...]
        feat_buf[:, 2 * l * H:(2 * l + 1) * H] = h
        feat_buf[:, (2 * l + 1) * H:2 * (l + 1) * H] = c

    feat = jnp.tanh(feat_buf[...]).astype(jnp.bfloat16)          # (Bt, 2*L*H)
    out_ref[...] = (jnp.dot(feat, wfc_ref[...],
                            preferred_element_type=jnp.float32)
                    + bfc_ref[...])


# ----------------------------------------------------------------------------
# One-time parameter preparation (hoisted out of the per-call forward):
# gate-column permutation [i,f,g,o]->[i,f,o,g], x2 fold into g columns,
# bf16 casts, FC padding, bf16 embedding table.
# ----------------------------------------------------------------------------
def _permute_and_scale_gates(a, H):
    return jnp.concatenate(
        [a[..., 0:2 * H], a[..., 3 * H:4 * H], 2.0 * a[..., 2 * H:3 * H]],
        axis=-1)


def prepare_params(params, *, num_layers, hidden_size):
    H = hidden_size
    embed_size = params["b_fc"].shape[-1]
    padded_embed = _round_up(embed_size, _LANE)

    prepped = {"embedding": params["embedding"].astype(jnp.bfloat16)}
    for l in range(num_layers):
        prepped[f"w_ih_{l}"] = _permute_and_scale_gates(
            params[f"w_ih_{l}"], H).astype(jnp.bfloat16)
        prepped[f"w_hh_{l}"] = _permute_and_scale_gates(
            params[f"w_hh_{l}"], H).astype(jnp.bfloat16)
        prepped[f"b_{l}"] = _permute_and_scale_gates(
            params[f"b_{l}"], H).astype(jnp.float32)

    w_fc = params["w_fc"]
    b_fc = params["b_fc"]
    if padded_embed != embed_size:
        w_fc = jnp.pad(w_fc, ((0, 0), (0, padded_embed - embed_size)))
        b_fc = jnp.pad(b_fc, ((0, 0), (0, padded_embed - embed_size)))
    prepped["w_fc"] = w_fc.astype(jnp.bfloat16)
    prepped["b_fc"] = b_fc.astype(jnp.float32)
    return prepped


# ----------------------------------------------------------------------------
# Forward wrapper: embedding gather + batch padding + batch-tile packing is
# glue in plain JAX; everything else runs in the kernel.
# ----------------------------------------------------------------------------
def qst_encoder_forward(question, prepped, *, num_layers, hidden_size,
                        embed_size):
    H = hidden_size
    B, S = question.shape
    E = prepped["embedding"].shape[-1]
    padded_embed = prepped["b_fc"].shape[-1]

    # TODO(synk): gather in-kernel (question in SMEM via scalar prefetch +
    # embedding table in VMEM) to avoid materializing (S, B, E) in HBM.
    x = jnp.take(prepped["embedding"], question, axis=0)          # (B, S, E) bf16

    # Pad batch to the bf16 sublane tile; pick a batch tile for the grid.
    Bpad = _round_up(max(B, _BF16_SUBLANE), _BF16_SUBLANE)
    Bt = math.gcd(Bpad, _LANE)               # multiple of 16, divides Bpad
    n_tiles = Bpad // Bt
    if Bpad != B:
        x = jnp.pad(x, ((0, Bpad - B), (0, 0), (0, 0)))

    # Batch-tile-major, time-major, flat 2D per tile: (n_tiles, S*Bt, E);
    # row index within a tile is t*Bt + b (matches in-kernel pl.ds(t*Bt, Bt)).
    x = jnp.transpose(x, (1, 0, 2))                               # (S, Bpad, E)
    x = x.reshape(S, n_tiles, Bt, E).transpose(1, 0, 2, 3).reshape(
        n_tiles, S * Bt, E)

    inputs = [x]
    in_specs = [pl.BlockSpec((None, S * Bt, E), lambda i: (i, 0, 0))]
    for l in range(num_layers):
        for name in (f"w_ih_{l}", f"w_hh_{l}", f"b_{l}"):
            w = prepped[name]
            inputs.append(w)
            in_specs.append(pl.BlockSpec(w.shape, lambda i: (0, 0)))
    for name in ("w_fc", "b_fc"):
        w = prepped[name]
        inputs.append(w)
        in_specs.append(pl.BlockSpec(w.shape, lambda i: (0, 0)))

    scratch_shapes = [
        pltpu.VMEM((S * Bt, 4 * H), jnp.bfloat16),                # projection
        pltpu.VMEM((S * Bt, H), jnp.bfloat16),                    # layer handoff
        pltpu.VMEM((Bt, 2 * num_layers * H), jnp.float32),        # packed (h, c)
    ]

    # Explicit VMEM budget (blocked inputs/outputs are double-buffered),
    # capped at v7x's 64 MiB physical VMEM.
    def nbytes(shape, dtype):
        return math.prod(shape) * jnp.dtype(dtype).itemsize
    block_bytes = (nbytes((S * Bt, E), jnp.bfloat16)
                   + sum(nbytes(a.shape, a.dtype) for a in inputs[1:])
                   + nbytes((Bt, padded_embed), jnp.float32))
    scratch_bytes = (nbytes((S * Bt, 4 * H), jnp.bfloat16)
                     + nbytes((S * Bt, H), jnp.bfloat16)
                     + nbytes((Bt, 2 * num_layers * H), jnp.float32))
    vmem_limit = min(64 * 1024 * 1024,
                     2 * block_bytes + scratch_bytes + (2 << 20))

    kernel = functools.partial(_qst_encoder_kernel, num_layers, hidden_size,
                               S, Bt)
    out = pl.pallas_call(
        kernel,
        out_shape=jax.ShapeDtypeStruct((Bpad, padded_embed), jnp.float32),
        grid_spec=pltpu.PrefetchScalarGridSpec(
            num_scalar_prefetch=0,
            grid=(n_tiles,),
            in_specs=in_specs,
            out_specs=pl.BlockSpec((Bt, padded_embed), lambda i: (i, 0)),
            scratch_shapes=scratch_shapes),
        compiler_params=pltpu.CompilerParams(
            dimension_semantics=("parallel",),
            vmem_limit_bytes=vmem_limit),
    )(*inputs)
    return out[:B, :embed_size]


# ----------------------------------------------------------------------------
# Pure-JAX f32 reference (same math as torch.nn.LSTM, gate order i,f,g,o).
# ----------------------------------------------------------------------------
def qst_encoder_ref(question, params, *, num_layers, hidden_size):
    H = hidden_size
    emb = params["embedding"]
    x = jnp.tanh(jnp.take(emb, question, axis=0))        # (B, S, E)
    x = jnp.transpose(x, (1, 0, 2))                      # (S, B, E)
    S, B, _ = x.shape
    layer_in = x
    hc = []
    for l in range(num_layers):
        wih = params[f"w_ih_{l}"]
        whh = params[f"w_hh_{l}"]
        bias = params[f"b_{l}"]
        h = jnp.zeros((B, H), jnp.float32)
        c = jnp.zeros((B, H), jnp.float32)
        outs = []
        for t in range(S):
            gates = layer_in[t] @ wih + h @ whh + bias
            i_g = jax.nn.sigmoid(gates[:, 0:H])
            f_g = jax.nn.sigmoid(gates[:, H:2 * H])
            g_g = jnp.tanh(gates[:, 2 * H:3 * H])
            o_g = jax.nn.sigmoid(gates[:, 3 * H:4 * H])
            c = f_g * c + i_g * g_g
            h = o_g * jnp.tanh(c)
            outs.append(h)
        layer_in = jnp.stack(outs, axis=0)
        hc += [h, c]
    feat = jnp.tanh(jnp.concatenate(hc, axis=1))
    return feat @ params["w_fc"] + params["b_fc"]


# ----------------------------------------------------------------------------
# Deterministic synthetic parameters (shapes per QstEncoder.__init__).
# ----------------------------------------------------------------------------
def make_params(key, *, qst_vocab_size, word_embed_size, embed_size,
                num_layers, hidden_size):
    H = hidden_size
    params = {}
    n_keys = 1 + 4 * num_layers + 2
    keys = jax.random.split(key, n_keys)
    ki = 0

    params["embedding"] = 0.5 * jax.random.normal(
        keys[ki], (qst_vocab_size, word_embed_size), jnp.float32); ki += 1

    for l in range(num_layers):
        in_feat = word_embed_size if l == 0 else H
        # stored transposed: (in_features, 4H) and (H, 4H), gate order [i,f,g,o]
        params[f"w_ih_{l}"] = 0.2 * jax.random.normal(
            keys[ki], (in_feat, 4 * H), jnp.float32); ki += 1
        params[f"w_hh_{l}"] = 0.2 * jax.random.normal(
            keys[ki], (H, 4 * H), jnp.float32); ki += 1
        b_ih = 0.1 * jax.random.normal(keys[ki], (4 * H,), jnp.float32); ki += 1
        b_hh = 0.1 * jax.random.normal(keys[ki], (4 * H,), jnp.float32); ki += 1
        params[f"b_{l}"] = (b_ih + b_hh).reshape(1, 4 * H)

    params["w_fc"] = 0.1 * jax.random.normal(
        keys[ki], (2 * num_layers * H, embed_size), jnp.float32); ki += 1
    params["b_fc"] = 0.1 * jax.random.normal(
        keys[ki], (1, embed_size), jnp.float32); ki += 1
    return params


if __name__ == "__main__":
    # Small shapes consistent with the module
    qst_vocab_size = 30
    word_embed_size = 32
    embed_size = 64
    num_layers = 2
    hidden_size = 32
    batch = 8
    seq_len = 8

    root = jax.random.PRNGKey(0)
    k_params, k_q = jax.random.split(root)
    params = make_params(k_params,
                         qst_vocab_size=qst_vocab_size,
                         word_embed_size=word_embed_size,
                         embed_size=embed_size,
                         num_layers=num_layers,
                         hidden_size=hidden_size)
    question = jax.random.randint(k_q, (batch, seq_len), 0, qst_vocab_size,
                                  dtype=jnp.int32)

    # One-time parameter prep (gate permutation, x2 fold, padding, bf16 casts).
    prepped = prepare_params(params, num_layers=num_layers,
                             hidden_size=hidden_size)

    fwd = jax.jit(functools.partial(qst_encoder_forward,
                                    num_layers=num_layers,
                                    hidden_size=hidden_size,
                                    embed_size=embed_size))
    out = jax.block_until_ready(fwd(question, prepped))

    ref = qst_encoder_ref(question, params,
                          num_layers=num_layers, hidden_size=hidden_size)
    assert out.shape == (batch, embed_size)
    # Kernel feeds bf16 operands to the MXU (f32 accumulation) and stores the
    # hoisted projection in bf16, so compare against the f32 reference with a
    # bf16-appropriate tolerance.
    assert jnp.allclose(out, ref, rtol=5e-2, atol=5e-2), "mismatch vs JAX reference"

    print("KERNEL_OK")
</pallas_src>

<mosaic_0001>
module attributes {stable_mosaic.version = 11 : i64} {
  func.func @_qst_encoder_kernel(%arg0: i32, %arg1: memref<1x128x32xbf16, #tpu.memory_space<vmem>>, %arg2: memref<32x128xbf16, #tpu.memory_space<vmem>>, %arg3: memref<32x128xbf16, #tpu.memory_space<vmem>>, %arg4: memref<1x128xf32, #tpu.memory_space<vmem>>, %arg5: memref<32x128xbf16, #tpu.memory_space<vmem>>, %arg6: memref<32x128xbf16, #tpu.memory_space<vmem>>, %arg7: memref<1x128xf32, #tpu.memory_space<vmem>>, %arg8: memref<128x128xbf16, #tpu.memory_space<vmem>>, %arg9: memref<1x128xf32, #tpu.memory_space<vmem>>, %arg10: memref<16x128xf32, #tpu.memory_space<vmem>>, %arg11: memref<128x128xbf16, #tpu.memory_space<vmem>>, %arg12: memref<128x32xbf16, #tpu.memory_space<vmem>>, %arg13: memref<16x128xf32, #tpu.memory_space<vmem>>) attributes {dimension_semantics = [#tpu.dimension_semantics<parallel>], iteration_bounds = array<i64: 1>, scalar_prefetch = 0 : i64, scratch_operands = 3 : i64, tpu.core_type = #tpu.core_type<tc>, window_params = [{transform_indices = @transform_0, window_bounds = array<i64: 1, 128, 32>}, {pipeline_mode = #tpu.pipeline_mode<synchronous>, transform_indices = @transform_1, window_bounds = array<i64: 32, 128>}, {pipeline_mode = #tpu.pipeline_mode<synchronous>, transform_indices = @transform_2, window_bounds = array<i64: 32, 128>}, {pipeline_mode = #tpu.pipeline_mode<synchronous>, transform_indices = @transform_3, window_bounds = array<i64: 1, 128>}, {pipeline_mode = #tpu.pipeline_mode<synchronous>, transform_indices = @transform_4, window_bounds = array<i64: 32, 128>}, {pipeline_mode = #tpu.pipeline_mode<synchronous>, transform_indices = @transform_5, window_bounds = array<i64: 32, 128>}, {pipeline_mode = #tpu.pipeline_mode<synchronous>, transform_indices = @transform_6, window_bounds = array<i64: 1, 128>}, {pipeline_mode = #tpu.pipeline_mode<synchronous>, transform_indices = @transform_7, window_bounds = array<i64: 128, 128>}, {pipeline_mode = #tpu.pipeline_mode<synchronous>, transform_indices = @transform_8, window_bounds = array<i64: 1, 128>}, {transform_indices = @transform_9, window_bounds = array<i64: 16, 128>}]} {
    %c0 = arith.constant 0 : index
    %c0_0 = arith.constant 0 : index
    %0 = vector.load %arg2[%c0, %c0_0] : memref<32x128xbf16, #tpu.memory_space<vmem>>, vector<32x128xbf16>
    %c0_1 = arith.constant 0 : index
    %c0_2 = arith.constant 0 : index
    %1 = vector.load %arg3[%c0_1, %c0_2] : memref<32x128xbf16, #tpu.memory_space<vmem>>, vector<32x128xbf16>
    %c0_3 = arith.constant 0 : index
    %c0_4 = arith.constant 0 : index
    %2 = vector.load %arg4[%c0_3, %c0_4] : memref<1x128xf32, #tpu.memory_space<vmem>>, vector<1x128xf32>
    %c0_5 = arith.constant 0 : index
    %c0_6 = arith.constant 0 : index
    %c0_7 = arith.constant 0 : index
    %3 = vector.load %arg1[%c0_5, %c0_6, %c0_7] : memref<1x128x32xbf16, #tpu.memory_space<vmem>>, vector<1x128x32xbf16>
    %4 = vector.shape_cast %3 : vector<1x128x32xbf16> to vector<128x32xbf16>
    %5 = math.tanh %4 : vector<128x32xbf16>
    %cst = arith.constant dense<0.000000e+00> : vector<128x128xf32>
    %6 = tpu.matmul %5, %0, %cst {dimension_numbers = #tpu.dot_dimension_numbers<[1], [0], [0], [1], [0, 0, 1, 1], [], []>} : vector<128x32xbf16>, vector<32x128xbf16>, vector<128x128xf32> -> vector<128x128xf32>
    %7 = vector.broadcast %2 : vector<1x128xf32> to vector<128x128xf32>
    %8 = arith.addf %6, %7 : vector<128x128xf32>
    %9 = arith.truncf %8 : vector<128x128xf32> to vector<128x128xbf16>
    %c0_8 = arith.constant 0 : index
    %c0_9 = arith.constant 0 : index
    %10 = vector.load %arg11[%c0_8, %c0_9] : memref<128x128xbf16, #tpu.memory_space<vmem>>, vector<128x128xbf16>
    tpu.vector_store %arg11[%c0_8, %c0_9], %9 {strides = array<i32>} : memref<128x128xbf16, #tpu.memory_space<vmem>>, vector<128x128xbf16>,
    %c0_10 = arith.constant 0 : index
    %c0_11 = arith.constant 0 : index
    %11 = vector.load %arg11[%c0_10, %c0_11] : memref<128x128xbf16, #tpu.memory_space<vmem>>, vector<16x128xbf16>
    %12 = arith.extf %11 : vector<16x128xbf16> to vector<16x128xf32>
    %13 = arith.negf %12 : vector<16x128xf32>
    %14 = math.exp %13 : vector<16x128xf32>
    %cst_12 = arith.constant 1.000000e+00 : f32
    %15 = vector.broadcast %cst_12 : f32 to vector<16x128xf32>
    %16 = arith.addf %15, %14 : vector<16x128xf32>
    %17 = arith.divf %15, %16 : vector<16x128xf32>
    %18 = vector.extract_strided_slice %17 {offsets = [0, 0], sizes = [16, 32], strides = [1, 1]} : vector<16x128xf32> to vector<16x32xf32>
    %19 = vector.extract_strided_slice %17 {offsets = [0, 64], sizes = [16, 32], strides = [1, 1]} : vector<16x128xf32> to vector<16x32xf32>
    %20 = vector.extract_strided_slice %17 {offsets = [0, 96], sizes = [16, 32], strides = [1, 1]} : vector<16x128xf32> to vector<16x32xf32>
    %cst_13 = arith.constant 2.000000e+00 : f32
    %21 = vector.broadcast %cst_13 : f32 to vector<16x32xf32>
    %22 = arith.mulf %21, %20 : vector<16x32xf32>
    %cst_14 = arith.constant 1.000000e+00 : f32
    %23 = vector.broadcast %cst_14 : f32 to vector<16x32xf32>
    %24 = arith.subf %22, %23 : vector<16x32xf32>
    %25 = arith.mulf %18, %24 : vector<16x32xf32>
    %26 = math.tanh %25 : vector<16x32xf32>
    %27 = arith.mulf %19, %26 : vector<16x32xf32>
    %28 = arith.truncf %27 : vector<16x32xf32> to vector<16x32xbf16>
    %c0_15 = arith.constant 0 : index
    %c0_16 = arith.constant 0 : index
    %29 = vector.load %arg12[%c0_15, %c0_16] : memref<128x32xbf16, #tpu.memory_space<vmem>>, vector<16x32xbf16>
    tpu.vector_store %arg12[%c0_15, %c0_16], %28 {strides = array<i32>} : memref<128x32xbf16, #tpu.memory_space<vmem>>, vector<16x32xbf16>,
    %c1_i32 = arith.constant 1 : i32
    %c16_i32 = arith.constant 16 : i32
    %30 = arith.muli %c1_i32, %c16_i32 : i32
    %31 = tpu.assume_multiple %30, 16 : i32
    %32 = arith.index_cast %31 : i32 to index
    %c0_17 = arith.constant 0 : index
    %33 = vector.load %arg11[%32, %c0_17] : memref<128x128xbf16, #tpu.memory_space<vmem>>, vector<16x128xbf16>
    %34 = arith.extf %33 : vector<16x128xbf16> to vector<16x128xf32>
    %35 = arith.truncf %27 : vector<16x32xf32> to vector<16x32xbf16>
    %cst_18 = arith.constant dense<0.000000e+00> : vector<16x128xf32>
    %36 = tpu.matmul %35, %1, %cst_18 {dimension_numbers = #tpu.dot_dimension_numbers<[1], [0], [0], [1], [0, 0, 1, 1], [], []>} : vector<16x32xbf16>, vector<32x128xbf16>, vector<16x128xf32> -> vector<16x128xf32>
    %37 = arith.addf %34, %36 : vector<16x128xf32>
    %38 = arith.negf %37 : vector<16x128xf32>
    %39 = math.exp %38 : vector<16x128xf32>
    %cst_19 = arith.constant 1.000000e+00 : f32
    %40 = vector.broadcast %cst_19 : f32 to vector<16x128xf32>
    %41 = arith.addf %40, %39 : vector<16x128xf32>
    %42 = arith.divf %40, %41 : vector<16x128xf32>
    %43 = vector.extract_strided_slice %42 {offsets = [0, 0], sizes = [16, 32], strides = [1, 1]} : vector<16x128xf32> to vector<16x32xf32>
    %44 = vector.extract_strided_slice %42 {offsets = [0, 32], sizes = [16, 32], strides = [1, 1]} : vector<16x128xf32> to vector<16x32xf32>
    %45 = vector.extract_strided_slice %42 {offsets = [0, 64], sizes = [16, 32], strides = [1, 1]} : vector<16x128xf32> to vector<16x32xf32>
    %46 = vector.extract_strided_slice %42 {offsets = [0, 96], sizes = [16, 32], strides = [1, 1]} : vector<16x128xf32> to vector<16x32xf32>
    %cst_20 = arith.constant 2.000000e+00 : f32
    %47 = vector.broadcast %cst_20 : f32 to vector<16x32xf32>
    %48 = arith.mulf %47, %46 : vector<16x32xf32>
    %cst_21 = arith.constant 1.000000e+00 : f32
    %49 = vector.broadcast %cst_21 : f32 to vector<16x32xf32>
    %50 = arith.subf %48, %49 : vector<16x32xf32>
    %51 = arith.mulf %44, %25 : vector<16x32xf32>
    %52 = arith.mulf %43, %50 : vector<16x32xf32>
    %53 = arith.addf %51, %52 : vector<16x32xf32>
    %54 = math.tanh %53 : vector<16x32xf32>
    %55 = arith.mulf %45, %54 : vector<16x32xf32>
    %56 = arith.truncf %55 : vector<16x32xf32> to vector<16x32xbf16>
    %57 = arith.index_cast %31 : i32 to index
    %c0_22 = arith.constant 0 : index
    %58 = vector.load %arg12[%57, %c0_22] : memref<128x32xbf16, #tpu.memory_space<vmem>>, vector<16x32xbf16>
    tpu.vector_store %arg12[%57, %c0_22], %56 {strides = array<i32>} : memref<128x32xbf16, #tpu.memory_space<vmem>>, vector<16x32xbf16>,
    %c2_i32 = arith.constant 2 : i32
    %c16_i32_23 = arith.constant 16 : i32
    %59 = arith.muli %c2_i32, %c16_i32_23 : i32
    %60 = tpu.assume_multiple %59, 16 : i32
    %61 = arith.index_cast %60 : i32 to index
    %c0_24 = arith.constant 0 : index
    %62 = vector.load %arg11[%61, %c0_24] : memref<128x128xbf16, #tpu.memory_space<vmem>>, vector<16x128xbf16>
    %63 = arith.extf %62 : vector<16x128xbf16> to vector<16x128xf32>
    %64 = arith.truncf %55 : vector<16x32xf32> to vector<16x32xbf16>
    %cst_25 = arith.constant dense<0.000000e+00> : vector<16x128xf32>
    %65 = tpu.matmul %64, %1, %cst_25 {dimension_numbers = #tpu.dot_dimension_numbers<[1], [0], [0], [1], [0, 0, 1, 1], [], []>} : vector<16x32xbf16>, vector<32x128xbf16>, vector<16x128xf32> -> vector<16x128xf32>
    %66 = arith.addf %63, %65 : vector<16x128xf32>
    %67 = arith.negf %66 : vector<16x128xf32>
    %68 = math.exp %67 : vector<16x128xf32>
    %cst_26 = arith.constant 1.000000e+00 : f32
    %69 = vector.broadcast %cst_26 : f32 to vector<16x128xf32>
    %70 = arith.addf %69, %68 : vector<16x128xf32>
    %71 = arith.divf %69, %70 : vector<16x128xf32>
    %72 = vector.extract_strided_slice %71 {offsets = [0, 0], sizes = [16, 32], strides = [1, 1]} : vector<16x128xf32> to vector<16x32xf32>
    %73 = vector.extract_strided_slice %71 {offsets = [0, 32], sizes = [16, 32], strides = [1, 1]} : vector<16x128xf32> to vector<16x32xf32>
    %74 = vector.extract_strided_slice %71 {offsets = [0, 64], sizes = [16, 32], strides = [1, 1]} : vector<16x128xf32> to vector<16x32xf32>
    %75 = vector.extract_strided_slice %71 {offsets = [0, 96], sizes = [16, 32], strides = [1, 1]} : vector<16x128xf32> to vector<16x32xf32>
    %cst_27 = arith.constant 2.000000e+00 : f32
    %76 = vector.broadcast %cst_27 : f32 to vector<16x32xf32>
    %77 = arith.mulf %76, %75 : vector<16x32xf32>
    %cst_28 = arith.constant 1.000000e+00 : f32
    %78 = vector.broadcast %cst_28 : f32 to vector<16x32xf32>
    %79 = arith.subf %77, %78 : vector<16x32xf32>
    %80 = arith.mulf %73, %53 : vector<16x32xf32>
    %81 = arith.mulf %72, %79 : vector<16x32xf32>
    %82 = arith.addf %80, %81 : vector<16x32xf32>
    %83 = math.tanh %82 : vector<16x32xf32>
    %84 = arith.mulf %74, %83 : vector<16x32xf32>
    %85 = arith.truncf %84 : vector<16x32xf32> to vector<16x32xbf16>
    %86 = arith.index_cast %60 : i32 to index
    %c0_29 = arith.constant 0 : index
    %87 = vector.load %arg12[%86, %c0_29] : memref<128x32xbf16, #tpu.memory_space<vmem>>, vector<16x32xbf16>
    tpu.vector_store %arg12[%86, %c0_29], %85 {strides = array<i32>} : memref<128x32xbf16, #tpu.memory_space<vmem>>, vector<16x32xbf16>,
    %c3_i32 = arith.constant 3 : i32
    %c16_i32_30 = arith.constant 16 : i32
    %88 = arith.muli %c3_i32, %c16_i32_30 : i32
    %89 = tpu.assume_multiple %88, 16 : i32
    %90 = arith.index_cast %89 : i32 to index
    %c0_31 = arith.constant 0 : index
    %91 = vector.load %arg11[%90, %c0_31] : memref<128x128xbf16, #tpu.memory_space<vmem>>, vector<16x128xbf16>
    %92 = arith.extf %91 : vector<16x128xbf16> to vector<16x128xf32>
    %93 = arith.truncf %84 : vector<16x32xf32> to vector<16x32xbf16>
    %cst_32 = arith.constant dense<0.000000e+00> : vector<16x128xf32>
    %94 = tpu.matmul %93, %1, %cst_32 {dimension_numbers = #tpu.dot_dimension_numbers<[1], [0], [0], [1], [0, 0, 1, 1], [], []>} : vector<16x32xbf16>, vector<32x128xbf16>, vector<16x128xf32> -> vector<16x128xf32>
    %95 = arith.addf %92, %94 : vector<16x128xf32>
    %96 = arith.negf %95 : vector<16x128xf32>
    %97 = math.exp %96 : vector<16x128xf32>
    %cst_33 = arith.constant 1.000000e+00 : f32
    %98 = vector.broadcast %cst_33 : f32 to vector<16x128xf32>
    %99 = arith.addf %98, %97 : vector<16x128xf32>
    %100 = arith.divf %98, %99 : vector<16x128xf32>
    %101 = vector.extract_strided_slice %100 {offsets = [0, 0], sizes = [16, 32], strides = [1, 1]} : vector<16x128xf32> to vector<16x32xf32>
    %102 = vector.extract_strided_slice %100 {offsets = [0, 32], sizes = [16, 32], strides = [1, 1]} : vector<16x128xf32> to vector<16x32xf32>
    %103 = vector.extract_strided_slice %100 {offsets = [0, 64], sizes = [16, 32], strides = [1, 1]} : vector<16x128xf32> to vector<16x32xf32>
    %104 = vector.extract_strided_slice %100 {offsets = [0, 96], sizes = [16, 32], strides = [1, 1]} : vector<16x128xf32> to vector<16x32xf32>
    %cst_34 = arith.constant 2.000000e+00 : f32
    %105 = vector.broadcast %cst_34 : f32 to vector<16x32xf32>
    %106 = arith.mulf %105, %104 : vector<16x32xf32>
    %cst_35 = arith.constant 1.000000e+00 : f32
    %107 = vector.broadcast %cst_35 : f32 to vector<16x32xf32>
    %108 = arith.subf %106, %107 : vector<16x32xf32>
    %109 = arith.mulf %102, %82 : vector<16x32xf32>
    %110 = arith.mulf %101, %108 : vector<16x32xf32>
    %111 = arith.addf %109, %110 : vector<16x32xf32>
    %112 = math.tanh %111 : vector<16x32xf32>
    %113 = arith.mulf %103, %112 : vector<16x32xf32>
    %114 = arith.truncf %113 : vector<16x32xf32> to vector<16x32xbf16>
    %115 = arith.index_cast %89 : i32 to index
    %c0_36 = arith.constant 0 : index
    %116 = vector.load %arg12[%115, %c0_36] : memref<128x32xbf16, #tpu.memory_space<vmem>>, vector<16x32xbf16>
    tpu.vector_store %arg12[%115, %c0_36], %114 {strides = array<i32>} : memref<128x32xbf16, #tpu.memory_space<vmem>>, vector<16x32xbf16>,
    %c4_i32 = arith.constant 4 : i32
    %c16_i32_37 = arith.constant 16 : i32
    %117 = arith.muli %c4_i32, %c16_i32_37 : i32
    %118 = tpu.assume_multiple %117, 16 : i32
    %119 = arith.index_cast %118 : i32 to index
    %c0_38 = arith.constant 0 : index
    %120 = vector.load %arg11[%119, %c0_38] : memref<128x128xbf16, #tpu.memory_space<vmem>>, vector<16x128xbf16>
    %121 = arith.extf %120 : vector<16x128xbf16> to vector<16x128xf32>
    %122 = arith.truncf %113 : vector<16x32xf32> to vector<16x32xbf16>
    %cst_39 = arith.constant dense<0.000000e+00> : vector<16x128xf32>
    %123 = tpu.matmul %122, %1, %cst_39 {dimension_numbers = #tpu.dot_dimension_numbers<[1], [0], [0], [1], [0, 0, 1, 1], [], []>} : vector<16x32xbf16>, vector<32x128xbf16>, vector<16x128xf32> -> vector<16x128xf32>
    %124 = arith.addf %121, %123 : vector<16x128xf32>
    %125 = arith.negf %124 : vector<16x128xf32>
    %126 = math.exp %125 : vector<16x128xf32>
    %cst_40 = arith.constant 1.000000e+00 : f32
    %127 = vector.broadcast %cst_40 : f32 to vector<16x128xf32>
    %128 = arith.addf %127, %126 : vector<16x128xf32>
    %129 = arith.divf %127, %128 : vector<16x128xf32>
    %130 = vector.extract_strided_slice %129 {offsets = [0, 0], sizes = [16, 32], strides = [1, 1]} : vector<16x128xf32> to vector<16x32xf32>
    %131 = vector.extract_strided_slice %129 {offsets = [0, 32], sizes = [16, 32], strides = [1, 1]} : vector<16x128xf32> to vector<16x32xf32>
    %132 = vector.extract_strided_slice %129 {offsets = [0, 64], sizes = [16, 32], strides = [1, 1]} : vector<16x128xf32> to vector<16x32xf32>
    %133 = vector.extract_strided_slice %129 {offsets = [0, 96], sizes = [16, 32], strides = [1, 1]} : vector<16x128xf32> to vector<16x32xf32>
    %cst_41 = arith.constant 2.000000e+00 : f32
    %134 = vector.broadcast %cst_41 : f32 to vector<16x32xf32>
    %135 = arith.mulf %134, %133 : vector<16x32xf32>
    %cst_42 = arith.constant 1.000000e+00 : f32
    %136 = vector.broadcast %cst_42 : f32 to vector<16x32xf32>
    %137 = arith.subf %135, %136 : vector<16x32xf32>
    %138 = arith.mulf %131, %111 : vector<16x32xf32>
    %139 = arith.mulf %130, %137 : vector<16x32xf32>
    %140 = arith.addf %138, %139 : vector<16x32xf32>
    %141 = math.tanh %140 : vector<16x32xf32>
    %142 = arith.mulf %132, %141 : vector<16x32xf32>
    %143 = arith.truncf %142 : vector<16x32xf32> to vector<16x32xbf16>
    %144 = arith.index_cast %118 : i32 to index
    %c0_43 = arith.constant 0 : index
    %145 = vector.load %arg12[%144, %c0_43] : memref<128x32xbf16, #tpu.memory_space<vmem>>, vector<16x32xbf16>
    tpu.vector_store %arg12[%144, %c0_43], %143 {strides = array<i32>} : memref<128x32xbf16, #tpu.memory_space<vmem>>, vector<16x32xbf16>,
    %c5_i32 = arith.constant 5 : i32
    %c16_i32_44 = arith.constant 16 : i32
    %146 = arith.muli %c5_i32, %c16_i32_44 : i32
    %147 = tpu.assume_multiple %146, 16 : i32
    %148 = arith.index_cast %147 : i32 to index
    %c0_45 = arith.constant 0 : index
    %149 = vector.load %arg11[%148, %c0_45] : memref<128x128xbf16, #tpu.memory_space<vmem>>, vector<16x128xbf16>
    %150 = arith.extf %149 : vector<16x128xbf16> to vector<16x128xf32>
    %151 = arith.truncf %142 : vector<16x32xf32> to vector<16x32xbf16>
    %cst_46 = arith.constant dense<0.000000e+00> : vector<16x128xf32>
    %152 = tpu.matmul %151, %1, %cst_46 {dimension_numbers = #tpu.dot_dimension_numbers<[1], [0], [0], [1], [0, 0, 1, 1], [], []>} : vector<16x32xbf16>, vector<32x128xbf16>, vector<16x128xf32> -> vector<16x128xf32>
    %153 = arith.addf %150, %152 : vector<16x128xf32>
    %154 = arith.negf %153 : vector<16x128xf32>
    %155 = math.exp %154 : vector<16x128xf32>
    %cst_47 = arith.constant 1.000000e+00 : f32
    %156 = vector.broadcast %cst_47 : f32 to vector<16x128xf32>
    %157 = arith.addf %156, %155 : vector<16x128xf32>
    %158 = arith.divf %156, %157 : vector<16x128xf32>
    %159 = vector.extract_strided_slice %158 {offsets = [0, 0], sizes = [16, 32], strides = [1, 1]} : vector<16x128xf32> to vector<16x32xf32>
    %160 = vector.extract_strided_slice %158 {offsets = [0, 32], sizes = [16, 32], strides = [1, 1]} : vector<16x128xf32> to vector<16x32xf32>
    %161 = vector.extract_strided_slice %158 {offsets = [0, 64], sizes = [16, 32], strides = [1, 1]} : vector<16x128xf32> to vector<16x32xf32>
    %162 = vector.extract_strided_slice %158 {offsets = [0, 96], sizes = [16, 32], strides = [1, 1]} : vector<16x128xf32> to vector<16x32xf32>
    %cst_48 = arith.constant 2.000000e+00 : f32
    %163 = vector.broadcast %cst_48 : f32 to vector<16x32xf32>
    %164 = arith.mulf %163, %162 : vector<16x32xf32>
    %cst_49 = arith.constant 1.000000e+00 : f32
    %165 = vector.broadcast %cst_49 : f32 to vector<16x32xf32>
    %166 = arith.subf %164, %165 : vector<16x32xf32>
    %167 = arith.mulf %160, %140 : vector<16x32xf32>
    %168 = arith.mulf %159, %166 : vector<16x32xf32>
    %169 = arith.addf %167, %168 : vector<16x32xf32>
    %170 = math.tanh %169 : vector<16x32xf32>
    %171 = arith.mulf %161, %170 : vector<16x32xf32>
    %172 = arith.truncf %171 : vector<16x32xf32> to vector<16x32xbf16>
    %173 = arith.index_cast %147 : i32 to index
    %c0_50 = arith.constant 0 : index
    %174 = vector.load %arg12[%173, %c0_50] : memref<128x32xbf16, #tpu.memory_space<vmem>>, vector<16x32xbf16>
    tpu.vector_store %arg12[%173, %c0_50], %172 {strides = array<i32>} : memref<128x32xbf16, #tpu.memory_space<vmem>>, vector<16x32xbf16>,
    %c6_i32 = arith.constant 6 : i32
    %c16_i32_51 = arith.constant 16 : i32
    %175 = arith.muli %c6_i32, %c16_i32_51 : i32
    %176 = tpu.assume_multiple %175, 16 : i32
    %177 = arith.index_cast %176 : i32 to index
    %c0_52 = arith.constant 0 : index
    %178 = vector.load %arg11[%177, %c0_52] : memref<128x128xbf16, #tpu.memory_space<vmem>>, vector<16x128xbf16>
    %179 = arith.extf %178 : vector<16x128xbf16> to vector<16x128xf32>
    %180 = arith.truncf %171 : vector<16x32xf32> to vector<16x32xbf16>
    %cst_53 = arith.constant dense<0.000000e+00> : vector<16x128xf32>
    %181 = tpu.matmul %180, %1, %cst_53 {dimension_numbers = #tpu.dot_dimension_numbers<[1], [0], [0], [1], [0, 0, 1, 1], [], []>} : vector<16x32xbf16>, vector<32x128xbf16>, vector<16x128xf32> -> vector<16x128xf32>
    %182 = arith.addf %179, %181 : vector<16x128xf32>
    %183 = arith.negf %182 : vector<16x128xf32>
    %184 = math.exp %183 : vector<16x128xf32>
    %cst_54 = arith.constant 1.000000e+00 : f32
    %185 = vector.broadcast %cst_54 : f32 to vector<16x128xf32>
    %186 = arith.addf %185, %184 : vector<16x128xf32>
    %187 = arith.divf %185, %186 : vector<16x128xf32>
    %188 = vector.extract_strided_slice %187 {offsets = [0, 0], sizes = [16, 32], strides = [1, 1]} : vector<16x128xf32> to vector<16x32xf32>
    %189 = vector.extract_strided_slice %187 {offsets = [0, 32], sizes = [16, 32], strides = [1, 1]} : vector<16x128xf32> to vector<16x32xf32>
    %190 = vector.extract_strided_slice %187 {offsets = [0, 64], sizes = [16, 32], strides = [1, 1]} : vector<16x128xf32> to vector<16x32xf32>
    %191 = vector.extract_strided_slice %187 {offsets = [0, 96], sizes = [16, 32], strides = [1, 1]} : vector<16x128xf32> to vector<16x32xf32>
    %cst_55 = arith.constant 2.000000e+00 : f32
    %192 = vector.broadcast %cst_55 : f32 to vector<16x32xf32>
    %193 = arith.mulf %192, %191 : vector<16x32xf32>
    %cst_56 = arith.constant 1.000000e+00 : f32
    %194 = vector.broadcast %cst_56 : f32 to vector<16x32xf32>
    %195 = arith.subf %193, %194 : vector<16x32xf32>
    %196 = arith.mulf %189, %169 : vector<16x32xf32>
    %197 = arith.mulf %188, %195 : vector<16x32xf32>
    %198 = arith.addf %196, %197 : vector<16x32xf32>
    %199 = math.tanh %198 : vector<16x32xf32>
    %200 = arith.mulf %190, %199 : vector<16x32xf32>
    %201 = arith.truncf %200 : vector<16x32xf32> to vector<16x32xbf16>
    %202 = arith.index_cast %176 : i32 to index
    %c0_57 = arith.constant 0 : index
    %203 = vector.load %arg12[%202, %c0_57] : memref<128x32xbf16, #tpu.memory_space<vmem>>, vector<16x32xbf16>
    tpu.vector_store %arg12[%202, %c0_57], %201 {strides = array<i32>} : memref<128x32xbf16, #tpu.memory_space<vmem>>, vector<16x32xbf16>,
    %c7_i32 = arith.constant 7 : i32
    %c16_i32_58 = arith.constant 16 : i32
    %204 = arith.muli %c7_i32, %c16_i32_58 : i32
    %205 = tpu.assume_multiple %204, 16 : i32
    %206 = arith.index_cast %205 : i32 to index
    %c0_59 = arith.constant 0 : index
    %207 = vector.load %arg11[%206, %c0_59] : memref<128x128xbf16, #tpu.memory_space<vmem>>, vector<16x128xbf16>
    %208 = arith.extf %207 : vector<16x128xbf16> to vector<16x128xf32>
    %209 = arith.truncf %200 : vector<16x32xf32> to vector<16x32xbf16>
    %cst_60 = arith.constant dense<0.000000e+00> : vector<16x128xf32>
    %210 = tpu.matmul %209, %1, %cst_60 {dimension_numbers = #tpu.dot_dimension_numbers<[1], [0], [0], [1], [0, 0, 1, 1], [], []>} : vector<16x32xbf16>, vector<32x128xbf16>, vector<16x128xf32> -> vector<16x128xf32>
    %211 = arith.addf %208, %210 : vector<16x128xf32>
    %212 = arith.negf %211 : vector<16x128xf32>
    %213 = math.exp %212 : vector<16x128xf32>
    %cst_61 = arith.constant 1.000000e+00 : f32
    %214 = vector.broadcast %cst_61 : f32 to vector<16x128xf32>
    %215 = arith.addf %214, %213 : vector<16x128xf32>
    %216 = arith.divf %214, %215 : vector<16x128xf32>
    %217 = vector.extract_strided_slice %216 {offsets = [0, 0], sizes = [16, 32], strides = [1, 1]} : vector<16x128xf32> to vector<16x32xf32>
    %218 = vector.extract_strided_slice %216 {offsets = [0, 32], sizes = [16, 32], strides = [1, 1]} : vector<16x128xf32> to vector<16x32xf32>
    %219 = vector.extract_strided_slice %216 {offsets = [0, 64], sizes = [16, 32], strides = [1, 1]} : vector<16x128xf32> to vector<16x32xf32>
    %220 = vector.extract_strided_slice %216 {offsets = [0, 96], sizes = [16, 32], strides = [1, 1]} : vector<16x128xf32> to vector<16x32xf32>
    %cst_62 = arith.constant 2.000000e+00 : f32
    %221 = vector.broadcast %cst_62 : f32 to vector<16x32xf32>
    %222 = arith.mulf %221, %220 : vector<16x32xf32>
    %cst_63 = arith.constant 1.000000e+00 : f32
    %223 = vector.broadcast %cst_63 : f32 to vector<16x32xf32>
    %224 = arith.subf %222, %223 : vector<16x32xf32>
    %225 = arith.mulf %218, %198 : vector<16x32xf32>
    %226 = arith.mulf %217, %224 : vector<16x32xf32>
    %227 = arith.addf %225, %226 : vector<16x32xf32>
    %228 = math.tanh %227 : vector<16x32xf32>
    %229 = arith.mulf %219, %228 : vector<16x32xf32>
    %230 = arith.truncf %229 : vector<16x32xf32> to vector<16x32xbf16>
    %231 = arith.index_cast %205 : i32 to index
    %c0_64 = arith.constant 0 : index
    %232 = vector.load %arg12[%231, %c0_64] : memref<128x32xbf16, #tpu.memory_space<vmem>>, vector<16x32xbf16>
    tpu.vector_store %arg12[%231, %c0_64], %230 {strides = array<i32>} : memref<128x32xbf16, #tpu.memory_space<vmem>>, vector<16x32xbf16>,
    %c7_i32_65 = arith.constant 7 : i32
    %c0_66 = arith.constant 0 : index
    %c0_67 = arith.constant 0 : index
    %233 = vector.load %arg13[%c0_66, %c0_67] : memref<16x128xf32, #tpu.memory_space<vmem>>, vector<16x32xf32>
    tpu.vector_store %arg13[%c0_66, %c0_67], %229 {strides = array<i32>} : memref<16x128xf32, #tpu.memory_space<vmem>>, vector<16x32xf32>,
    %c0_68 = arith.constant 0 : index
    %c32 = arith.constant 32 : index
    %234 = vector.load %arg13[%c0_68, %c32] : memref<16x128xf32, #tpu.memory_space<vmem>>, vector<16x32xf32>
    tpu.vector_store %arg13[%c0_68, %c32], %227 {strides = array<i32>} : memref<16x128xf32, #tpu.memory_space<vmem>>, vector<16x32xf32>,
    %c0_69 = arith.constant 0 : index
    %c0_70 = arith.constant 0 : index
    %235 = vector.load %arg5[%c0_69, %c0_70] : memref<32x128xbf16, #tpu.memory_space<vmem>>, vector<32x128xbf16>
    %c0_71 = arith.constant 0 : index
    %c0_72 = arith.constant 0 : index
    %236 = vector.load %arg6[%c0_71, %c0_72] : memref<32x128xbf16, #tpu.memory_space<vmem>>, vector<32x128xbf16>
    %c0_73 = arith.constant 0 : index
    %c0_74 = arith.constant 0 : index
    %237 = vector.load %arg7[%c0_73, %c0_74] : memref<1x128xf32, #tpu.memory_space<vmem>>, vector<1x128xf32>
    %c0_75 = arith.constant 0 : index
    %c0_76 = arith.constant 0 : index
    %238 = vector.load %arg12[%c0_75, %c0_76] : memref<128x32xbf16, #tpu.memory_space<vmem>>, vector<128x32xbf16>
    %cst_77 = arith.constant dense<0.000000e+00> : vector<128x128xf32>
    %239 = tpu.matmul %238, %235, %cst_77 {dimension_numbers = #tpu.dot_dimension_numbers<[1], [0], [0], [1], [0, 0, 1, 1], [], []>} : vector<128x32xbf16>, vector<32x128xbf16>, vector<128x128xf32> -> vector<128x128xf32>
    %240 = vector.broadcast %237 : vector<1x128xf32> to vector<128x128xf32>
    %241 = arith.addf %239, %240 : vector<128x128xf32>
    %242 = arith.truncf %241 : vector<128x128xf32> to vector<128x128xbf16>
    %c0_78 = arith.constant 0 : index
    %c0_79 = arith.constant 0 : index
    %243 = vector.load %arg11[%c0_78, %c0_79] : memref<128x128xbf16, #tpu.memory_space<vmem>>, vector<128x128xbf16>
    tpu.vector_store %arg11[%c0_78, %c0_79], %242 {strides = array<i32>} : memref<128x128xbf16, #tpu.memory_space<vmem>>, vector<128x128xbf16>,
    %c0_80 = arith.constant 0 : index
    %c0_81 = arith.constant 0 : index
    %244 = vector.load %arg11[%c0_80, %c0_81] : memref<128x128xbf16, #tpu.memory_space<vmem>>, vector<16x128xbf16>
    %245 = arith.extf %244 : vector<16x128xbf16> to vector<16x128xf32>
    %246 = arith.negf %245 : vector<16x128xf32>
    %247 = math.exp %246 : vector<16x128xf32>
    %cst_82 = arith.constant 1.000000e+00 : f32
    %248 = vector.broadcast %cst_82 : f32 to vector<16x128xf32>
    %249 = arith.addf %248, %247 : vector<16x128xf32>
    %250 = arith.divf %248, %249 : vector<16x128xf32>
    %251 = vector.extract_strided_slice %250 {offsets = [0, 0], sizes = [16, 32], strides = [1, 1]} : vector<16x128xf32> to vector<16x32xf32>
    %252 = vector.extract_strided_slice %250 {offsets = [0, 64], sizes = [16, 32], strides = [1, 1]} : vector<16x128xf32> to vector<16x32xf32>
    %253 = vector.extract_strided_slice %250 {offsets = [0, 96], sizes = [16, 32], strides = [1, 1]} : vector<16x128xf32> to vector<16x32xf32>
    %cst_83 = arith.constant 2.000000e+00 : f32
    %254 = vector.broadcast %cst_83 : f32 to vector<16x32xf32>
    %255 = arith.mulf %254, %253 : vector<16x32xf32>
    %cst_84 = arith.constant 1.000000e+00 : f32
    %256 = vector.broadcast %cst_84 : f32 to vector<16x32xf32>
    %257 = arith.subf %255, %256 : vector<16x32xf32>
    %258 = arith.mulf %251, %257 : vector<16x32xf32>
    %259 = math.tanh %258 : vector<16x32xf32>
    %260 = arith.mulf %252, %259 : vector<16x32xf32>
    %c1_i32_85 = arith.constant 1 : i32
    %c16_i32_86 = arith.constant 16 : i32
    %261 = arith.muli %c1_i32_85, %c16_i32_86 : i32
    %262 = tpu.assume_multiple %261, 16 : i32
    %263 = arith.index_cast %262 : i32 to index
    %c0_87 = arith.constant 0 : index
    %264 = vector.load %arg11[%263, %c0_87] : memref<128x128xbf16, #tpu.memory_space<vmem>>, vector<16x128xbf16>
    %265 = arith.extf %264 : vector<16x128xbf16> to vector<16x128xf32>
    %266 = arith.truncf %260 : vector<16x32xf32> to vector<16x32xbf16>
    %cst_88 = arith.constant dense<0.000000e+00> : vector<16x128xf32>
    %267 = tpu.matmul %266, %236, %cst_88 {dimension_numbers = #tpu.dot_dimension_numbers<[1], [0], [0], [1], [0, 0, 1, 1], [], []>} : vector<16x32xbf16>, vector<32x128xbf16>, vector<16x128xf32> -> vector<16x128xf32>
    %268 = arith.addf %265, %267 : vector<16x128xf32>
    %269 = arith.negf %268 : vector<16x128xf32>
    %270 = math.exp %269 : vector<16x128xf32>
    %cst_89 = arith.constant 1.000000e+00 : f32
    %271 = vector.broadcast %cst_89 : f32 to vector<16x128xf32>
    %272 = arith.addf %271, %270 : vector<16x128xf32>
    %273 = arith.divf %271, %272 : vector<16x128xf32>
    %274 = vector.extract_strided_slice %273 {offsets = [0, 0], sizes = [16, 32], strides = [1, 1]} : vector<16x128xf32> to vector<16x32xf32>
    %275 = vector.extract_strided_slice %273 {offsets = [0, 32], sizes = [16, 32], strides = [1, 1]} : vector<16x128xf32> to vector<16x32xf32>
    %276 = vector.extract_strided_slice %273 {offsets = [0, 64], sizes = [16, 32], strides = [1, 1]} : vector<16x128xf32> to vector<16x32xf32>
    %277 = vector.extract_strided_slice %273 {offsets = [0, 96], sizes = [16, 32], strides = [1, 1]} : vector<16x128xf32> to vector<16x32xf32>
    %cst_90 = arith.constant 2.000000e+00 : f32
    %278 = vector.broadcast %cst_90 : f32 to vector<16x32xf32>
    %279 = arith.mulf %278, %277 : vector<16x32xf32>
    %cst_91 = arith.constant 1.000000e+00 : f32
    %280 = vector.broadcast %cst_91 : f32 to vector<16x32xf32>
    %281 = arith.subf %279, %280 : vector<16x32xf32>
    %282 = arith.mulf %275, %258 : vector<16x32xf32>
    %283 = arith.mulf %274, %281 : vector<16x32xf32>
    %284 = arith.addf %282, %283 : vector<16x32xf32>
    %285 = math.tanh %284 : vector<16x32xf32>
    %286 = arith.mulf %276, %285 : vector<16x32xf32>
    %c2_i32_92 = arith.constant 2 : i32
    %c16_i32_93 = arith.constant 16 : i32
    %287 = arith.muli %c2_i32_92, %c16_i32_93 : i32
    %288 = tpu.assume_multiple %287, 16 : i32
    %289 = arith.index_cast %288 : i32 to index
    %c0_94 = arith.constant 0 : index
    %290 = vector.load %arg11[%289, %c0_94] : memref<128x128xbf16, #tpu.memory_space<vmem>>, vector<16x128xbf16>
    %291 = arith.extf %290 : vector<16x128xbf16> to vector<16x128xf32>
    %292 = arith.truncf %286 : vector<16x32xf32> to vector<16x32xbf16>
    %cst_95 = arith.constant dense<0.000000e+00> : vector<16x128xf32>
    %293 = tpu.matmul %292, %236, %cst_95 {dimension_numbers = #tpu.dot_dimension_numbers<[1], [0], [0], [1], [0, 0, 1, 1], [], []>} : vector<16x32xbf16>, vector<32x128xbf16>, vector<16x128xf32> -> vector<16x128xf32>
    %294 = arith.addf %291, %293 : vector<16x128xf32>
    %295 = arith.negf %294 : vector<16x128xf32>
    %296 = math.exp %295 : vector<16x128xf32>
    %cst_96 = arith.constant 1.000000e+00 : f32
    %297 = vector.broadcast %cst_96 : f32 to vector<16x128xf32>
    %298 = arith.addf %297, %296 : vector<16x128xf32>
    %299 = arith.divf %297, %298 : vector<16x128xf32>
    %300 = vector.extract_strided_slice %299 {offsets = [0, 0], sizes = [16, 32], strides = [1, 1]} : vector<16x128xf32> to vector<16x32xf32>
    %301 = vector.extract_strided_slice %299 {offsets = [0, 32], sizes = [16, 32], strides = [1, 1]} : vector<16x128xf32> to vector<16x32xf32>
    %302 = vector.extract_strided_slice %299 {offsets = [0, 64], sizes = [16, 32], strides = [1, 1]} : vector<16x128xf32> to vector<16x32xf32>
    %303 = vector.extract_strided_slice %299 {offsets = [0, 96], sizes = [16, 32], strides = [1, 1]} : vector<16x128xf32> to vector<16x32xf32>
    %cst_97 = arith.constant 2.000000e+00 : f32
    %304 = vector.broadcast %cst_97 : f32 to vector<16x32xf32>
    %305 = arith.mulf %304, %303 : vector<16x32xf32>
    %cst_98 = arith.constant 1.000000e+00 : f32
    %306 = vector.broadcast %cst_98 : f32 to vector<16x32xf32>
    %307 = arith.subf %305, %306 : vector<16x32xf32>
    %308 = arith.mulf %301, %284 : vector<16x32xf32>
    %309 = arith.mulf %300, %307 : vector<16x32xf32>
    %310 = arith.addf %308, %309 : vector<16x32xf32>
    %311 = math.tanh %310 : vector<16x32xf32>
    %312 = arith.mulf %302, %311 : vector<16x32xf32>
    %c3_i32_99 = arith.constant 3 : i32
    %c16_i32_100 = arith.constant 16 : i32
    %313 = arith.muli %c3_i32_99, %c16_i32_100 : i32
    %314 = tpu.assume_multiple %313, 16 : i32
    %315 = arith.index_cast %314 : i32 to index
    %c0_101 = arith.constant 0 : index
    %316 = vector.load %arg11[%315, %c0_101] : memref<128x128xbf16, #tpu.memory_space<vmem>>, vector<16x128xbf16>
    %317 = arith.extf %316 : vector<16x128xbf16> to vector<16x128xf32>
    %318 = arith.truncf %312 : vector<16x32xf32> to vector<16x32xbf16>
    %cst_102 = arith.constant dense<0.000000e+00> : vector<16x128xf32>
    %319 = tpu.matmul %318, %236, %cst_102 {dimension_numbers = #tpu.dot_dimension_numbers<[1], [0], [0], [1], [0, 0, 1, 1], [], []>} : vector<16x32xbf16>, vector<32x128xbf16>, vector<16x128xf32> -> vector<16x128xf32>
    %320 = arith.addf %317, %319 : vector<16x128xf32>
    %321 = arith.negf %320 : vector<16x128xf32>
    %322 = math.exp %321 : vector<16x128xf32>
    %cst_103 = arith.constant 1.000000e+00 : f32
    %323 = vector.broadcast %cst_103 : f32 to vector<16x128xf32>
    %324 = arith.addf %323, %322 : vector<16x128xf32>
    %325 = arith.divf %323, %324 : vector<16x128xf32>
    %326 = vector.extract_strided_slice %325 {offsets = [0, 0], sizes = [16, 32], strides = [1, 1]} : vector<16x128xf32> to vector<16x32xf32>
    %327 = vector.extract_strided_slice %325 {offsets = [0, 32], sizes = [16, 32], strides = [1, 1]} : vector<16x128xf32> to vector<16x32xf32>
    %328 = vector.extract_strided_slice %325 {offsets = [0, 64], sizes = [16, 32], strides = [1, 1]} : vector<16x128xf32> to vector<16x32xf32>
    %329 = vector.extract_strided_slice %325 {offsets = [0, 96], sizes = [16, 32], strides = [1, 1]} : vector<16x128xf32> to vector<16x32xf32>
    %cst_104 = arith.constant 2.000000e+00 : f32
    %330 = vector.broadcast %cst_104 : f32 to vector<16x32xf32>
    %331 = arith.mulf %330, %329 : vector<16x32xf32>
    %cst_105 = arith.constant 1.000000e+00 : f32
    %332 = vector.broadcast %cst_105 : f32 to vector<16x32xf32>
    %333 = arith.subf %331, %332 : vector<16x32xf32>
    %334 = arith.mulf %327, %310 : vector<16x32xf32>
    %335 = arith.mulf %326, %333 : vector<16x32xf32>
    %336 = arith.addf %334, %335 : vector<16x32xf32>
    %337 = math.tanh %336 : vector<16x32xf32>
    %338 = arith.mulf %328, %337 : vector<16x32xf32>
    %c4_i32_106 = arith.constant 4 : i32
    %c16_i32_107 = arith.constant 16 : i32
    %339 = arith.muli %c4_i32_106, %c16_i32_107 : i32
    %340 = tpu.assume_multiple %339, 16 : i32
    %341 = arith.index_cast %340 : i32 to index
    %c0_108 = arith.constant 0 : index
    %342 = vector.load %arg11[%341, %c0_108] : memref<128x128xbf16, #tpu.memory_space<vmem>>, vector<16x128xbf16>
    %343 = arith.extf %342 : vector<16x128xbf16> to vector<16x128xf32>
    %344 = arith.truncf %338 : vector<16x32xf32> to vector<16x32xbf16>
    %cst_109 = arith.constant dense<0.000000e+00> : vector<16x128xf32>
    %345 = tpu.matmul %344, %236, %cst_109 {dimension_numbers = #tpu.dot_dimension_numbers<[1], [0], [0], [1], [0, 0, 1, 1], [], []>} : vector<16x32xbf16>, vector<32x128xbf16>, vector<16x128xf32> -> vector<16x128xf32>
    %346 = arith.addf %343, %345 : vector<16x128xf32>
    %347 = arith.negf %346 : vector<16x128xf32>
    %348 = math.exp %347 : vector<16x128xf32>
    %cst_110 = arith.constant 1.000000e+00 : f32
    %349 = vector.broadcast %cst_110 : f32 to vector<16x128xf32>
    %350 = arith.addf %349, %348 : vector<16x128xf32>
    %351 = arith.divf %349, %350 : vector<16x128xf32>
    %352 = vector.extract_strided_slice %351 {offsets = [0, 0], sizes = [16, 32], strides = [1, 1]} : vector<16x128xf32> to vector<16x32xf32>
    %353 = vector.extract_strided_slice %351 {offsets = [0, 32], sizes = [16, 32], strides = [1, 1]} : vector<16x128xf32> to vector<16x32xf32>
    %354 = vector.extract_strided_slice %351 {offsets = [0, 64], sizes = [16, 32], strides = [1, 1]} : vector<16x128xf32> to vector<16x32xf32>
    %355 = vector.extract_strided_slice %351 {offsets = [0, 96], sizes = [16, 32], strides = [1, 1]} : vector<16x128xf32> to vector<16x32xf32>
    %cst_111 = arith.constant 2.000000e+00 : f32
    %356 = vector.broadcast %cst_111 : f32 to vector<16x32xf32>
    %357 = arith.mulf %356, %355 : vector<16x32xf32>
    %cst_112 = arith.constant 1.000000e+00 : f32
    %358 = vector.broadcast %cst_112 : f32 to vector<16x32xf32>
    %359 = arith.subf %357, %358 : vector<16x32xf32>
    %360 = arith.mulf %353, %336 : vector<16x32xf32>
    %361 = arith.mulf %352, %359 : vector<16x32xf32>
    %362 = arith.addf %360, %361 : vector<16x32xf32>
    %363 = math.tanh %362 : vector<16x32xf32>
    %364 = arith.mulf %354, %363 : vector<16x32xf32>
    %c5_i32_113 = arith.constant 5 : i32
    %c16_i32_114 = arith.constant 16 : i32
    %365 = arith.muli %c5_i32_113, %c16_i32_114 : i32
    %366 = tpu.assume_multiple %365, 16 : i32
    %367 = arith.index_cast %366 : i32 to index
    %c0_115 = arith.constant 0 : index
    %368 = vector.load %arg11[%367, %c0_115] : memref<128x128xbf16, #tpu.memory_space<vmem>>, vector<16x128xbf16>
    %369 = arith.extf %368 : vector<16x128xbf16> to vector<16x128xf32>
    %370 = arith.truncf %364 : vector<16x32xf32> to vector<16x32xbf16>
    %cst_116 = arith.constant dense<0.000000e+00> : vector<16x128xf32>
    %371 = tpu.matmul %370, %236, %cst_116 {dimension_numbers = #tpu.dot_dimension_numbers<[1], [0], [0], [1], [0, 0, 1, 1], [], []>} : vector<16x32xbf16>, vector<32x128xbf16>, vector<16x128xf32> -> vector<16x128xf32>
    %372 = arith.addf %369, %371 : vector<16x128xf32>
    %373 = arith.negf %372 : vector<16x128xf32>
    %374 = math.exp %373 : vector<16x128xf32>
    %cst_117 = arith.constant 1.000000e+00 : f32
    %375 = vector.broadcast %cst_117 : f32 to vector<16x128xf32>
    %376 = arith.addf %375, %374 : vector<16x128xf32>
    %377 = arith.divf %375, %376 : vector<16x128xf32>
    %378 = vector.extract_strided_slice %377 {offsets = [0, 0], sizes = [16, 32], strides = [1, 1]} : vector<16x128xf32> to vector<16x32xf32>
    %379 = vector.extract_strided_slice %377 {offsets = [0, 32], sizes = [16, 32], strides = [1, 1]} : vector<16x128xf32> to vector<16x32xf32>
    %380 = vector.extract_strided_slice %377 {offsets = [0, 64], sizes = [16, 32], strides = [1, 1]} : vector<16x128xf32> to vector<16x32xf32>
    %381 = vector.extract_strided_slice %377 {offsets = [0, 96], sizes = [16, 32], strides = [1, 1]} : vector<16x128xf32> to vector<16x32xf32>
    %cst_118 = arith.constant 2.000000e+00 : f32
    %382 = vector.broadcast %cst_118 : f32 to vector<16x32xf32>
    %383 = arith.mulf %382, %381 : vector<16x32xf32>
    %cst_119 = arith.constant 1.000000e+00 : f32
    %384 = vector.broadcast %cst_119 : f32 to vector<16x32xf32>
    %385 = arith.subf %383, %384 : vector<16x32xf32>
    %386 = arith.mulf %379, %362 : vector<16x32xf32>
    %387 = arith.mulf %378, %385 : vector<16x32xf32>
    %388 = arith.addf %386, %387 : vector<16x32xf32>
    %389 = math.tanh %388 : vector<16x32xf32>
    %390 = arith.mulf %380, %389 : vector<16x32xf32>
    %c6_i32_120 = arith.constant 6 : i32
    %c16_i32_121 = arith.constant 16 : i32
    %391 = arith.muli %c6_i32_120, %c16_i32_121 : i32
    %392 = tpu.assume_multiple %391, 16 : i32
    %393 = arith.index_cast %392 : i32 to index
    %c0_122 = arith.constant 0 : index
    %394 = vector.load %arg11[%393, %c0_122] : memref<128x128xbf16, #tpu.memory_space<vmem>>, vector<16x128xbf16>
    %395 = arith.extf %394 : vector<16x128xbf16> to vector<16x128xf32>
    %396 = arith.truncf %390 : vector<16x32xf32> to vector<16x32xbf16>
    %cst_123 = arith.constant dense<0.000000e+00> : vector<16x128xf32>
    %397 = tpu.matmul %396, %236, %cst_123 {dimension_numbers = #tpu.dot_dimension_numbers<[1], [0], [0], [1], [0, 0, 1, 1], [], []>} : vector<16x32xbf16>, vector<32x128xbf16>, vector<16x128xf32> -> vector<16x128xf32>
    %398 = arith.addf %395, %397 : vector<16x128xf32>
    %399 = arith.negf %398 : vector<16x128xf32>
    %400 = math.exp %399 : vector<16x128xf32>
    %cst_124 = arith.constant 1.000000e+00 : f32
    %401 = vector.broadcast %cst_124 : f32 to vector<16x128xf32>
    %402 = arith.addf %401, %400 : vector<16x128xf32>
    %403 = arith.divf %401, %402 : vector<16x128xf32>
    %404 = vector.extract_strided_slice %403 {offsets = [0, 0], sizes = [16, 32], strides = [1, 1]} : vector<16x128xf32> to vector<16x32xf32>
    %405 = vector.extract_strided_slice %403 {offsets = [0, 32], sizes = [16, 32], strides = [1, 1]} : vector<16x128xf32> to vector<16x32xf32>
    %406 = vector.extract_strided_slice %403 {offsets = [0, 64], sizes = [16, 32], strides = [1, 1]} : vector<16x128xf32> to vector<16x32xf32>
    %407 = vector.extract_strided_slice %403 {offsets = [0, 96], sizes = [16, 32], strides = [1, 1]} : vector<16x128xf32> to vector<16x32xf32>
    %cst_125 = arith.constant 2.000000e+00 : f32
    %408 = vector.broadcast %cst_125 : f32 to vector<16x32xf32>
    %409 = arith.mulf %408, %407 : vector<16x32xf32>
    %cst_126 = arith.constant 1.000000e+00 : f32
    %410 = vector.broadcast %cst_126 : f32 to vector<16x32xf32>
    %411 = arith.subf %409, %410 : vector<16x32xf32>
    %412 = arith.mulf %405, %388 : vector<16x32xf32>
    %413 = arith.mulf %404, %411 : vector<16x32xf32>
    %414 = arith.addf %412, %413 : vector<16x32xf32>
    %415 = math.tanh %414 : vector<16x32xf32>
    %416 = arith.mulf %406, %415 : vector<16x32xf32>
    %c7_i32_127 = arith.constant 7 : i32
    %c16_i32_128 = arith.constant 16 : i32
    %417 = arith.muli %c7_i32_127, %c16_i32_128 : i32
    %418 = tpu.assume_multiple %417, 16 : i32
    %419 = arith.index_cast %418 : i32 to index
    %c0_129 = arith.constant 0 : index
    %420 = vector.load %arg11[%419, %c0_129] : memref<128x128xbf16, #tpu.memory_space<vmem>>, vector<16x128xbf16>
    %421 = arith.extf %420 : vector<16x128xbf16> to vector<16x128xf32>
    %422 = arith.truncf %416 : vector<16x32xf32> to vector<16x32xbf16>
    %cst_130 = arith.constant dense<0.000000e+00> : vector<16x128xf32>
    %423 = tpu.matmul %422, %236, %cst_130 {dimension_numbers = #tpu.dot_dimension_numbers<[1], [0], [0], [1], [0, 0, 1, 1], [], []>} : vector<16x32xbf16>, vector<32x128xbf16>, vector<16x128xf32> -> vector<16x128xf32>
    %424 = arith.addf %421, %423 : vector<16x128xf32>
    %425 = arith.negf %424 : vector<16x128xf32>
    %426 = math.exp %425 : vector<16x128xf32>
    %cst_131 = arith.constant 1.000000e+00 : f32
    %427 = vector.broadcast %cst_131 : f32 to vector<16x128xf32>
    %428 = arith.addf %427, %426 : vector<16x128xf32>
    %429 = arith.divf %427, %428 : vector<16x128xf32>
    %430 = vector.extract_strided_slice %429 {offsets = [0, 0], sizes = [16, 32], strides = [1, 1]} : vector<16x128xf32> to vector<16x32xf32>
    %431 = vector.extract_strided_slice %429 {offsets = [0, 32], sizes = [16, 32], strides = [1, 1]} : vector<16x128xf32> to vector<16x32xf32>
    %432 = vector.extract_strided_slice %429 {offsets = [0, 64], sizes = [16, 32], strides = [1, 1]} : vector<16x128xf32> to vector<16x32xf32>
    %433 = vector.extract_strided_slice %429 {offsets = [0, 96], sizes = [16, 32], strides = [1, 1]} : vector<16x128xf32> to vector<16x32xf32>
    %cst_132 = arith.constant 2.000000e+00 : f32
    %434 = vector.broadcast %cst_132 : f32 to vector<16x32xf32>
    %435 = arith.mulf %434, %433 : vector<16x32xf32>
    %cst_133 = arith.constant 1.000000e+00 : f32
    %436 = vector.broadcast %cst_133 : f32 to vector<16x32xf32>
    %437 = arith.subf %435, %436 : vector<16x32xf32>
    %438 = arith.mulf %431, %414 : vector<16x32xf32>
    %439 = arith.mulf %430, %437 : vector<16x32xf32>
    %440 = arith.addf %438, %439 : vector<16x32xf32>
    %441 = math.tanh %440 : vector<16x32xf32>
    %442 = arith.mulf %432, %441 : vector<16x32xf32>
    %c7_i32_134 = arith.constant 7 : i32
    %c0_135 = arith.constant 0 : index
    %c64 = arith.constant 64 : index
    %443 = vector.load %arg13[%c0_135, %c64] : memref<16x128xf32, #tpu.memory_space<vmem>>, vector<16x32xf32>
    tpu.vector_store %arg13[%c0_135, %c64], %442 {strides = array<i32>} : memref<16x128xf32, #tpu.memory_space<vmem>>, vector<16x32xf32>,
    %c0_136 = arith.constant 0 : index
    %c96 = arith.constant 96 : index
    %444 = vector.load %arg13[%c0_136, %c96] : memref<16x128xf32, #tpu.memory_space<vmem>>, vector<16x32xf32>
    tpu.vector_store %arg13[%c0_136, %c96], %440 {strides = array<i32>} : memref<16x128xf32, #tpu.memory_space<vmem>>, vector<16x32xf32>,
    %c0_137 = arith.constant 0 : index
    %c0_138 = arith.constant 0 : index
    %445 = vector.load %arg13[%c0_137, %c0_138] : memref<16x128xf32, #tpu.memory_space<vmem>>, vector<16x128xf32>
    %446 = math.tanh %445 : vector<16x128xf32>
    %447 = arith.truncf %446 : vector<16x128xf32> to vector<16x128xbf16>
    %c0_139 = arith.constant 0 : index
    %c0_140 = arith.constant 0 : index
    %448 = vector.load %arg8[%c0_139, %c0_140] : memref<128x128xbf16, #tpu.memory_space<vmem>>, vector<128x128xbf16>
    %cst_141 = arith.constant dense<0.000000e+00> : vector<16x128xf32>
    %449 = tpu.matmul %447, %448, %cst_141 {dimension_numbers = #tpu.dot_dimension_numbers<[1], [0], [0], [1], [0, 0, 1, 1], [], []>} : vector<16x128xbf16>, vector<128x128xbf16>, vector<16x128xf32> -> vector<16x128xf32>
    %c0_142 = arith.constant 0 : index
    %c0_143 = arith.constant 0 : index
    %450 = vector.load %arg9[%c0_142, %c0_143] : memref<1x128xf32, #tpu.memory_space<vmem>>, vector<1x128xf32>
    %451 = vector.broadcast %450 : vector<1x128xf32> to vector<16x128xf32>
    %452 = arith.addf %449, %451 : vector<16x128xf32>
    %c0_144 = arith.constant 0 : index
    %c0_145 = arith.constant 0 : index
    %453 = vector.load %arg10[%c0_144, %c0_145] : memref<16x128xf32, #tpu.memory_space<vmem>>, vector<16x128xf32>
    tpu.vector_store %arg10[%c0_144, %c0_145], %452 {strides = array<i32>} : memref<16x128xf32, #tpu.memory_space<vmem>>, vector<16x128xf32>,
    return
  }
  func.func @transform_0(%arg0: i32) -> (i32, i32, i32) {
    %c0_i32 = arith.constant 0 : i32
    %c0_i32_0 = arith.constant 0 : i32
    %c0_i32_1 = arith.constant 0 : i32
    return %arg0, %c0_i32, %c0_i32_0 : i32, i32, i32
  }
  func.func @transform_1(%arg0: i32) -> (i32, i32) {
    %c0_i32 = arith.constant 0 : i32
    %c0_i32_0 = arith.constant 0 : i32
    %c0_i32_1 = arith.constant 0 : i32
    return %c0_i32, %c0_i32_0 : i32, i32
  }
  func.func @transform_2(%arg0: i32) -> (i32, i32) {
    %c0_i32 = arith.constant 0 : i32
    %c0_i32_0 = arith.constant 0 : i32
    %c0_i32_1 = arith.constant 0 : i32
    return %c0_i32, %c0_i32_0 : i32, i32
  }
  func.func @transform_3(%arg0: i32) -> (i32, i32) {
    %c0_i32 = arith.constant 0 : i32
    %c0_i32_0 = arith.constant 0 : i32
    %c0_i32_1 = arith.constant 0 : i32
    return %c0_i32, %c0_i32_0 : i32, i32
  }
  func.func @transform_4(%arg0: i32) -> (i32, i32) {
    %c0_i32 = arith.constant 0 : i32
    %c0_i32_0 = arith.constant 0 : i32
    %c0_i32_1 = arith.constant 0 : i32
    return %c0_i32, %c0_i32_0 : i32, i32
  }
  func.func @transform_5(%arg0: i32) -> (i32, i32) {
    %c0_i32 = arith.constant 0 : i32
    %c0_i32_0 = arith.constant 0 : i32
    %c0_i32_1 = arith.constant 0 : i32
    return %c0_i32, %c0_i32_0 : i32, i32
  }
  func.func @transform_6(%arg0: i32) -> (i32, i32) {
    %c0_i32 = arith.constant 0 : i32
    %c0_i32_0 = arith.constant 0 : i32
    %c0_i32_1 = arith.constant 0 : i32
    return %c0_i32, %c0_i32_0 : i32, i32
  }
  func.func @transform_7(%arg0: i32) -> (i32, i32) {
    %c0_i32 = arith.constant 0 : i32
    %c0_i32_0 = arith.constant 0 : i32
    %c0_i32_1 = arith.constant 0 : i32
    return %c0_i32, %c0_i32_0 : i32, i32
  }
  func.func @transform_8(%arg0: i32) -> (i32, i32) {
    %c0_i32 = arith.constant 0 : i32
    %c0_i32_0 = arith.constant 0 : i32
    %c0_i32_1 = arith.constant 0 : i32
    return %c0_i32, %c0_i32_0 : i32, i32
  }
  func.func @transform_9(%arg0: i32) -> (i32, i32) {
    %c0_i32 = arith.constant 0 : i32
    %c0_i32_0 = arith.constant 0 : i32
    return %arg0, %c0_i32 : i32, i32
  }
}

</mosaic_0001>

<llo_original>
// kernel: qst_encoder_forward.1
$region0: #{qst_encoder_forward.1}
  #allocation0 [shape = 'u32[]', space=smem, size = 0x4, offset = 0x4, fixed_abs, tag = 'smem constant byte address 0x4 - core index']
  #allocation1 [shape = 'u32[72,128]{1,0:T(1,128)}', space=vmem, size = 0x9000, scoped, tag = 'internal scratch']
  #allocation2 [shape = 'bf16[128,128]{1,0:T(8,128)(2,1)}', space=vmem, size = 0x8000, scoped, tag = 'scratch operand']
  #allocation3 [shape = 'bf16[128,32]{1,0:T(8,128)(2,1)}', space=vmem, size = 0x8000, scoped, tag = 'scratch operand']
  #allocation4 [shape = 'f32[16,128]{1,0:T(8,128)}', space=vmem, size = 0x2000, scoped, tag = 'scratch operand']
  %s0 = inlined_call_operand.vmem [shape: bf16[1,128,32], index: 0, kind: input, shape index: {}]
  %s1 = inlined_call_operand.vmem [shape: bf16[32,128], index: 1, kind: input, shape index: {}]
  %s2 = inlined_call_operand.vmem [shape: bf16[32,128], index: 2, kind: input, shape index: {}]
  %s3 = inlined_call_operand.vmem [shape: f32[1,128], index: 3, kind: input, shape index: {}]
  %s4 = inlined_call_operand.vmem [shape: bf16[32,128], index: 4, kind: input, shape index: {}]
  %s5 = inlined_call_operand.vmem [shape: bf16[32,128], index: 5, kind: input, shape index: {}]
  %s6 = inlined_call_operand.vmem [shape: f32[1,128], index: 6, kind: input, shape index: {}]
  %s7 = inlined_call_operand.vmem [shape: bf16[128,128], index: 7, kind: input, shape index: {}]
  %s8 = inlined_call_operand.vmem [shape: f32[1,128], index: 8, kind: input, shape index: {}]
  %s9 = inlined_call_operand.vmem [shape: f32[16,128], index: 9, kind: output, shape index: {}]
  %s10 = sld [smem:[#allocation0]]
  $region46: #{qst_encoder_forward.1} parent=0
    _
  %s12 = ssub.s32 1, %s10
  %s13 = scalar_select 0, %s12, %s10
  // Predicated region
  $region2: #{qst_encoder_forward.1} parent=0 // pred_check
    _
  $region3: #{qst_encoder_forward.1} parent=0 // pred_check_branch
    %15 = sbr.rel (0) target = $region5
  $region4: #{qst_encoder_forward.1} parent=0 // pred_region
    _
  $region5: #{qst_encoder_forward.1} parent=0 // pred_fallthru
    _
  // Predicated region
  $region6: #{qst_encoder_forward.1} parent=0 // pred_check
    _
  $region7: #{qst_encoder_forward.1} parent=0 // pred_check_branch
    %17 = sbr.rel (0) target = $region9
  $region8: #{qst_encoder_forward.1} parent=0 // pred_region
    _
  $region9: #{qst_encoder_forward.1} parent=0 // pred_fallthru
    _
  // Predicated region
  $region10: #{qst_encoder_forward.1} parent=0 // pred_check
    _
  $region11: #{qst_encoder_forward.1} parent=0 // pred_check_branch
    %19 = sbr.rel (0) target = $region13
  $region12: #{qst_encoder_forward.1} parent=0 // pred_region
    _
  $region13: #{qst_encoder_forward.1} parent=0 // pred_fallthru
    _
  // Predicated region
  $region14: #{qst_encoder_forward.1} parent=0 // pred_check
    _
  $region15: #{qst_encoder_forward.1} parent=0 // pred_check_branch
    %21 = sbr.rel (0) target = $region17
  $region16: #{qst_encoder_forward.1} parent=0 // pred_region
    _
  $region17: #{qst_encoder_forward.1} parent=0 // pred_fallthru
    _
  // Predicated region
  $region18: #{qst_encoder_forward.1} parent=0 // pred_check
    _
  $region19: #{qst_encoder_forward.1} parent=0 // pred_check_branch
    %23 = sbr.rel (0) target = $region21
  $region20: #{qst_encoder_forward.1} parent=0 // pred_region
    _
  $region21: #{qst_encoder_forward.1} parent=0 // pred_fallthru
    _
  // Predicated region
  $region22: #{qst_encoder_forward.1} parent=0 // pred_check
    _
  $region23: #{qst_encoder_forward.1} parent=0 // pred_check_branch
    %25 = sbr.rel (0) target = $region25
  $region24: #{qst_encoder_forward.1} parent=0 // pred_region
    _
  $region25: #{qst_encoder_forward.1} parent=0 // pred_fallthru
    _
  // Predicated region
  $region26: #{qst_encoder_forward.1} parent=0 // pred_check
    _
  $region27: #{qst_encoder_forward.1} parent=0 // pred_check_branch
    %27 = sbr.rel (0) target = $region29
  $region28: #{qst_encoder_forward.1} parent=0 // pred_region
    _
  $region29: #{qst_encoder_forward.1} parent=0 // pred_fallthru
    _
  // Predicated region
  $region30: #{qst_encoder_forward.1} parent=0 // pred_check
    _
  $region31: #{qst_encoder_forward.1} parent=0 // pred_check_branch
    %29 = sbr.rel (0) target = $region33
  $region32: #{qst_encoder_forward.1} parent=0 // pred_region
    _
  $region33: #{qst_encoder_forward.1} parent=0 // pred_fallthru
    _
  // Predicated region
  $region34: #{qst_encoder_forward.1} parent=0 // pred_check
    _
  $region35: #{qst_encoder_forward.1} parent=0 // pred_check_branch
    %31 = sbr.rel (0) target = $region37
  $region36: #{qst_encoder_forward.1} parent=0 // pred_region
    _
  $region37: #{qst_encoder_forward.1} parent=0 // pred_fallthru
    _
  %v33 = vld [vmem:[%s1] sm:$0xf]
  %v34 = vld [vmem:[%s1 + $0x4] sm:$0xf]
  %v35 = vld [vmem:[%s1 + $0x8] sm:$0xf]
  %v36 = vld [vmem:[%s1 + $0xc] sm:$0xf]
  %v37 = vld [vmem:[%s2] sm:$0xf]
  %v38 = vld [vmem:[%s2 + $0x4] sm:$0xf]
  %v39 = vld [vmem:[%s2 + $0x8] sm:$0xf]
  %v40 = vld [vmem:[%s2 + $0xc] sm:$0xf]
  %v41 = vld [vmem:[%s3] sm:$0x1]
  %v42 = vld [vmem:[%s0] sm:$0xf]
  %v43 = vld [vmem:[%s0 + $0x4] sm:$0xf]
  %v44 = vld [vmem:[%s0 + $0x8] sm:$0xf]
  %v45 = vld [vmem:[%s0 + $0xc] sm:$0xf]
  %v46 = vld [vmem:[%s0 + $0x10] sm:$0xf]
  %v47 = vld [vmem:[%s0 + $0x14] sm:$0xf]
  %v48 = vld [vmem:[%s0 + $0x18] sm:$0xf]
  %v49 = vld [vmem:[%s0 + $0x1c] sm:$0xf]
  %v50 = vld [vmem:[%s0 + $0x20] sm:$0xf]
  %v51 = vld [vmem:[%s0 + $0x24] sm:$0xf]
  %v52 = vld [vmem:[%s0 + $0x28] sm:$0xf]
  %v53 = vld [vmem:[%s0 + $0x2c] sm:$0xf]
  %v54 = vld [vmem:[%s0 + $0x30] sm:$0xf]
  %v55 = vld [vmem:[%s0 + $0x34] sm:$0xf]
  %v56 = vld [vmem:[%s0 + $0x38] sm:$0xf]
  %v57 = vld [vmem:[%s0 + $0x3c] sm:$0xf]
  %v58 = vunpack.c.l.bf16 %v42
  %v59 = vunpack.c.l.bf16 %v43
  %v60 = vunpack.c.l.bf16 %v44
  %v61 = vunpack.c.l.bf16 %v45
  %v62 = vunpack.c.l.bf16 %v46
  %v63 = vunpack.c.l.bf16 %v47
  %v64 = vunpack.c.l.bf16 %v48
  %v65 = vunpack.c.l.bf16 %v49
  %v66 = vunpack.c.l.bf16 %v50
  %v67 = vunpack.c.l.bf16 %v51
  %v68 = vunpack.c.l.bf16 %v52
  %v69 = vunpack.c.l.bf16 %v53
  %v70 = vunpack.c.l.bf16 %v54
  %v71 = vunpack.c.l.bf16 %v55
  %v72 = vunpack.c.l.bf16 %v56
  %v73 = vunpack.c.l.bf16 %v57
  %v74 = vtanh.pop %v58
  %v75 = vtanh.pop %v59
  %v76 = vtanh.pop %v60
  %v77 = vtanh.pop %v61
  %v78 = vtanh.pop %v62
  %v79 = vtanh.pop %v63
  %v80 = vtanh.pop %v64
  %v81 = vtanh.pop %v65
  %v82 = vtanh.pop %v66
  %v83 = vtanh.pop %v67
  %v84 = vtanh.pop %v68
  %v85 = vtanh.pop %v69
  %v86 = vtanh.pop %v70
  %v87 = vtanh.pop %v71
  %v88 = vtanh.pop %v72
  %v89 = vtanh.pop %v73
  %v90 = vpack.c.bf16 %v75, %v74
  %v91 = vpack.c.bf16 %v77, %v76
  %v92 = vpack.c.bf16 %v79, %v78
  %v93 = vpack.c.bf16 %v81, %v80
  %v94 = vpack.c.bf16 %v83, %v82
  %v95 = vpack.c.bf16 %v85, %v84
  %v96 = vpack.c.bf16 %v87, %v86
  %v97 = vpack.c.bf16 %v89, %v88
  %v99 = vperm.slane %v41, 0
  %v105 = vunpack.c.l.b16 %v33
  %v106 = vunpack.c.l.b16 %v34
  %v107 = vunpack.c.l.b16 %v35
  %v108 = vunpack.c.l.b16 %v36
  %v109 = vpack.c.b16 %v106, %v105
  %v110 = vpack.c.b16 %v108, %v107
  %vm113 = vcmask 261120
  %v115 = vsel %vm113, %v90, 0
  %v118 = vsel %vm113, %v91, 0
  %v121 = vsel %vm113, %v92, 0
  %v124 = vsel %vm113, %v93, 0
  %v127 = vsel %vm113, %v94, 0
  %v130 = vsel %vm113, %v95, 0
  %v133 = vsel %vm113, %v96, 0
  %v136 = vsel %vm113, %v97, 0
  %138 = vmatpush.bf16.msra.mxu0 0
  %139 = vmatpush.bf16.msra.mxu0 0
  %140 = vmatpush.bf16.msra.mxu0 0
  %141 = vmatpush.bf16.msra.mxu0 0
  %142 = vmatpush.bf16.msra.mxu0 0
  %143 = vmatpush.bf16.msra.mxu0 0
  %144 = vmatpush.bf16.msra.mxu0 %v110
  %145 = vmatpush.bf16.msra.mxu0 %v109
  %146 = vmatmul.bf16.gmra.mxu0 %v115
  %v147 = vpop.f32.mrf.mxu0
  %v148 = vadd.f32 %v99, %v147
  %v149 = vpop.f32.mrf.mxu0
  %v150 = vadd.f32 %v99, %v149
  %151 = vmatmul.bf16.gmra.mxu0 %v118
  %v152 = vpop.f32.mrf.mxu0
  %v153 = vadd.f32 %v99, %v152
  %v154 = vpop.f32.mrf.mxu0
  %v155 = vadd.f32 %v99, %v154
  %156 = vmatmul.bf16.gmra.mxu0 %v121
  %v157 = vpop.f32.mrf.mxu0
  %v158 = vadd.f32 %v99, %v157
  %v159 = vpop.f32.mrf.mxu0
  %v160 = vadd.f32 %v99, %v159
  %161 = vmatmul.bf16.gmra.mxu0 %v124
  %v162 = vpop.f32.mrf.mxu0
  %v163 = vadd.f32 %v99, %v162
  %v164 = vpop.f32.mrf.mxu0
  %v165 = vadd.f32 %v99, %v164
  %166 = vmatmul.bf16.gmra.mxu0 %v127
  %v167 = vpop.f32.mrf.mxu0
  %v168 = vadd.f32 %v99, %v167
  %v169 = vpop.f32.mrf.mxu0
  %v170 = vadd.f32 %v99, %v169
  %171 = vmatmul.bf16.gmra.mxu0 %v130
  %v172 = vpop.f32.mrf.mxu0
  %v173 = vadd.f32 %v99, %v172
  %v174 = vpop.f32.mrf.mxu0
  %v175 = vadd.f32 %v99, %v174
  %176 = vmatmul.bf16.gmra.mxu0 %v133
  %v177 = vpop.f32.mrf.mxu0
  %v178 = vadd.f32 %v99, %v177
  %v179 = vpop.f32.mrf.mxu0
  %v180 = vadd.f32 %v99, %v179
  %181 = vmatmul.bf16.gmra.mxu0 %v136
  %v182 = vpop.f32.mrf.mxu0
  %v183 = vadd.f32 %v99, %v182
  %v184 = vpop.f32.mrf.mxu0
  %v185 = vadd.f32 %v99, %v184
  %186 = vdwg.mxu0
  %v187 = vpack.c.bf16 %v148, %v148
  %v188 = vpack.c.bf16 %v150, %v150
  %v189 = vpack.c.bf16 %v153, %v153
  %v190 = vpack.c.bf16 %v155, %v155
  %v191 = vpack.c.bf16 %v158, %v158
  %v192 = vpack.c.bf16 %v160, %v160
  %v193 = vpack.c.bf16 %v163, %v163
  %v194 = vpack.c.bf16 %v165, %v165
  %v195 = vpack.c.bf16 %v168, %v168
  %v196 = vpack.c.bf16 %v170, %v170
  %v197 = vpack.c.bf16 %v173, %v173
  %v198 = vpack.c.bf16 %v175, %v175
  %v199 = vpack.c.bf16 %v178, %v178
  %v200 = vpack.c.bf16 %v180, %v180
  %v201 = vpack.c.bf16 %v183, %v183
  %v202 = vpack.c.bf16 %v185, %v185
  %203 = vst [vmem:[#allocation2] sm:$0xf] %v187
  %204 = vst [vmem:[#allocation2 + $0x4] sm:$0xf] %v188
  %205 = vst [vmem:[#allocation2 + $0x8] sm:$0xf] %v189
  %206 = vst [vmem:[#allocation2 + $0xc] sm:$0xf] %v190
  %207 = vst [vmem:[#allocation2 + $0x10] sm:$0xf] %v191
  %208 = vst [vmem:[#allocation2 + $0x14] sm:$0xf] %v192
  %209 = vst [vmem:[#allocation2 + $0x18] sm:$0xf] %v193
  %210 = vst [vmem:[#allocation2 + $0x1c] sm:$0xf] %v194
  %211 = vst [vmem:[#allocation2 + $0x20] sm:$0xf] %v195
  %212 = vst [vmem:[#allocation2 + $0x24] sm:$0xf] %v196
  %213 = vst [vmem:[#allocation2 + $0x28] sm:$0xf] %v197
  %214 = vst [vmem:[#allocation2 + $0x2c] sm:$0xf] %v198
  %215 = vst [vmem:[#allocation2 + $0x30] sm:$0xf] %v199
  %216 = vst [vmem:[#allocation2 + $0x34] sm:$0xf] %v200
  %217 = vst [vmem:[#allocation2 + $0x38] sm:$0xf] %v201
  %218 = vst [vmem:[#allocation2 + $0x3c] sm:$0xf] %v202
  %v219 = vld [vmem:[#allocation2] sm:$0xf]
  %v220 = vld [vmem:[#allocation2 + $0x4] sm:$0xf]
  %v221 = vunpack.c.l.bf16 %v219
  %v222 = vunpack.c.l.bf16 %v220
  %v223 = vxor.u32 %v221, 2147483648
  %v224 = vxor.u32 %v222, 2147483648
  %v225 = vmul.f32 %v223, 1.442695
  %v226 = vpow.pop %v225
  %v227 = vmul.f32 %v224, 1.442695
  %v228 = vpow.pop %v227
  %v229 = vadd.f32 %v226, 1.0
  %v230 = vadd.f32 %v228, 1.0
  %v231 = vrcp.pop %v229
  %v232 = vmul.f32 %v229, %v231
  %v233 = vsub.f32 1.0, %v232
  %v234 = vmul.f32 %v231, %v233
  %v235 = vadd.f32 %v231, %v234
  %vm236 = vweird.f32 %v229
  %vm237 = vweird.f32 %v231
  %vm238 = vmor %vm236, %vm237
  %v239 = vsel %vm238, %v231, %v235
  %v240 = vand.u32 2147483647, %v229
  %vm241 = vcmp.eq.f32.partialorder %v240, 8.507059e+37
  %v242 = vand.u32 %v229, 2147483648
  %v243 = vor.u32 1.1754944e-38, %v242
  %v244 = vsel %vm241, %v243, %v239
  %v245 = vmul.f32 1.0, %v244
  %v246 = vrcp.pop %v230
  %v247 = vmul.f32 %v230, %v246
  %v248 = vsub.f32 1.0, %v247
  %v249 = vmul.f32 %v246, %v248
  %v250 = vadd.f32 %v246, %v249
  %vm251 = vweird.f32 %v230
  %vm252 = vweird.f32 %v246
  %vm253 = vmor %vm251, %vm252
  %v254 = vsel %vm253, %v246, %v250
  %v255 = vand.u32 2147483647, %v230
  %vm256 = vcmp.eq.f32.partialorder %v255, 8.507059e+37
  %v257 = vand.u32 %v230, 2147483648
  %v258 = vor.u32 1.1754944e-38, %v257
  %v259 = vsel %vm256, %v258, %v254
  %v260 = vmul.f32 1.0, %v259
  %v261 = vmul.f32 %v245, 2.0
  %v262 = vmul.f32 %v260, 2.0
  %v263 = vsub.f32 %v261, 1.0
  %v264 = vsub.f32 %v262, 1.0
  %267 = vrot.lane.b32.xlu0 %v263, 32
  %v268 = vpop.permute.xlu0 %267
  %269 = vrot.lane.b32.xlu0 %v264, 32
  %v270 = vpop.permute.xlu0 %269
  %v273 = vmul.f32 %v245, %v268
  %v274 = vmul.f32 %v260, %v270
  %v275 = vtanh.pop %v273
  %v276 = vtanh.pop %v274
  %279 = vrot.lane.b32.xlu0 %v275, 64
  %v280 = vpop.permute.xlu0 %279
  %281 = vrot.lane.b32.xlu0 %v276, 64
  %v282 = vpop.permute.xlu0 %281
  %v285 = vmul.f32 %v245, %v280
  %v286 = vmul.f32 %v260, %v282
  %v287 = vpack.c.bf16 %v285, %v285
  %v288 = vpack.c.bf16 %v286, %v286
  %291 = vrot.lane.b32.xlu0 %v287, 64
  %v292 = vpop.permute.xlu0 %291
  %293 = vrot.lane.b32.xlu0 %v288, 64
  %v294 = vpop.permute.xlu0 %293
  %vm297 = vcmask 257024
  %298 = vst.msk [vmem:[#allocation3] sm:$0xf] %vm297, %v292
  %299 = vst.msk [vmem:[#allocation3 + $0x4] sm:$0xf] %vm297, %v294
  %s300 = scalar_lea.vmem [#allocation2], 8
  %v301 = vld [vmem:[%s300] sm:$0xf]
  %v302 = vld [vmem:[%s300 + $0x4] sm:$0xf]
  %v303 = vunpack.c.l.bf16 %v301
  %v304 = vunpack.c.l.bf16 %v302
  %v305 = vunpack.c.l.b16 %v287
  %v306 = vunpack.c.l.b16 %v288
  %v307 = vpack.c.b16 %v306, %v305
  %308 = vrot.lane.b32.xlu0 %v307, 64
  %v309 = vpop.permute.xlu0 %308
  %v314 = vunpack.c.l.b16 %v37
  %v315 = vunpack.c.l.b16 %v38
  %v316 = vunpack.c.l.b16 %v39
  %v317 = vunpack.c.l.b16 %v40
  %v318 = vpack.c.b16 %v315, %v314
  %v319 = vpack.c.b16 %v317, %v316
  %v323 = vsel %vm113, %v309, 0
  %325 = vmatpush.bf16.msra.mxu0 0
  %326 = vmatpush.bf16.msra.mxu0 0
  %327 = vmatpush.bf16.msra.mxu0 0
  %328 = vmatpush.bf16.msra.mxu0 0
  %329 = vmatpush.bf16.msra.mxu0 0
  %330 = vmatpush.bf16.msra.mxu0 0
  %331 = vmatpush.bf16.msra.mxu0 %v319
  %332 = vmatpush.bf16.msra.mxu0 %v318
  %333 = vmatmul.bf16.gmra.mxu0 %v323
  %v334 = vpop.f32.mrf.mxu0
  %v335 = vadd.f32 0.0, %v334
  %v336 = vpop.f32.mrf.mxu0
  %v337 = vadd.f32 0.0, %v336
  %338 = vdwg.mxu0
  %v339 = vadd.f32 %v303, %v335
  %v340 = vadd.f32 %v304, %v337
  %v341 = vxor.u32 %v339, 2147483648
  %v342 = vxor.u32 %v340, 2147483648
  %v343 = vmul.f32 %v341, 1.442695
  %v344 = vpow.pop %v343
  %v345 = vmul.f32 %v342, 1.442695
  %v346 = vpow.pop %v345
  %v347 = vadd.f32 %v344, 1.0
  %v348 = vadd.f32 %v346, 1.0
  %v349 = vrcp.pop %v347
  %v350 = vmul.f32 %v347, %v349
  %v351 = vsub.f32 1.0, %v350
  %v352 = vmul.f32 %v349, %v351
  %v353 = vadd.f32 %v349, %v352
  %vm354 = vweird.f32 %v347
  %vm355 = vweird.f32 %v349
  %vm356 = vmor %vm354, %vm355
  %v357 = vsel %vm356, %v349, %v353
  %v358 = vand.u32 2147483647, %v347
  %vm359 = vcmp.eq.f32.partialorder %v358, 8.507059e+37
  %v360 = vand.u32 %v347, 2147483648
  %v361 = vor.u32 1.1754944e-38, %v360
  %v362 = vsel %vm359, %v361, %v357
  %v363 = vmul.f32 1.0, %v362
  %v364 = vrcp.pop %v348
  %v365 = vmul.f32 %v348, %v364
  %v366 = vsub.f32 1.0, %v365
  %v367 = vmul.f32 %v364, %v366
  %v368 = vadd.f32 %v364, %v367
  %vm369 = vweird.f32 %v348
  %vm370 = vweird.f32 %v364
  %vm371 = vmor %vm369, %vm370
  %v372 = vsel %vm371, %v364, %v368
  %v373 = vand.u32 2147483647, %v348
  %vm374 = vcmp.eq.f32.partialorder %v373, 8.507059e+37
  %v375 = vand.u32 %v348, 2147483648
  %v376 = vor.u32 1.1754944e-38, %v375
  %v377 = vsel %vm374, %v376, %v372
  %v378 = vmul.f32 1.0, %v377
  %v379 = vmul.f32 %v363, 2.0
  %v380 = vmul.f32 %v378, 2.0
  %v381 = vsub.f32 %v379, 1.0
  %v382 = vsub.f32 %v380, 1.0
  %385 = vrot.lane.b32.xlu0 %v273, 32
  %v386 = vpop.permute.xlu0 %385
  %387 = vrot.lane.b32.xlu0 %v274, 32
  %v388 = vpop.permute.xlu0 %387
  %v391 = vmul.f32 %v363, %v386
  %v392 = vmul.f32 %v378, %v388
  %395 = vrot.lane.b32.xlu0 %v381, 32
  %v396 = vpop.permute.xlu0 %395
  %397 = vrot.lane.b32.xlu0 %v382, 32
  %v398 = vpop.permute.xlu0 %397
  %v401 = vmul.f32 %v363, %v396
  %v402 = vmul.f32 %v378, %v398
  %405 = vrot.lane.b32.xlu0 %v401, 32
  %v406 = vpop.permute.xlu0 %405
  %407 = vrot.lane.b32.xlu0 %v402, 32
  %v408 = vpop.permute.xlu0 %407
  %v411 = vadd.f32 %v391, %v406
  %v412 = vadd.f32 %v392, %v408
  %v413 = vtanh.pop %v411
  %v414 = vtanh.pop %v412
  %417 = vrot.lane.b32.xlu0 %v413, 32
  %v418 = vpop.permute.xlu0 %417
  %419 = vrot.lane.b32.xlu0 %v414, 32
  %v420 = vpop.permute.xlu0 %419
  %v423 = vmul.f32 %v363, %v418
  %v424 = vmul.f32 %v378, %v420
  %v425 = vpack.c.bf16 %v423, %v423
  %v426 = vpack.c.bf16 %v424, %v424
  %429 = vrot.lane.b32.xlu0 %v425, 64
  %v430 = vpop.permute.xlu0 %429
  %431 = vrot.lane.b32.xlu0 %v426, 64
  %v432 = vpop.permute.xlu0 %431
  %s435 = scalar_lea.vmem [#allocation3], 8
  %436 = vst.msk [vmem:[%s435] sm:$0xf] %vm297, %v430
  %437 = vst.msk [vmem:[%s435 + $0x4] sm:$0xf] %vm297, %v432
  %s438 = scalar_lea.vmem [#allocation2], 16
  %v439 = vld [vmem:[%s438] sm:$0xf]
  %v440 = vld [vmem:[%s438 + $0x4] sm:$0xf]
  %v441 = vunpack.c.l.bf16 %v439
  %v442 = vunpack.c.l.bf16 %v440
  %v443 = vunpack.c.l.b16 %v425
  %v444 = vunpack.c.l.b16 %v426
  %v445 = vpack.c.b16 %v444, %v443
  %446 = vrot.lane.b32.xlu0 %v445, 64
  %v447 = vpop.permute.xlu0 %446
  %v449 = vsel %vm113, %v447, 0
  %451 = vmatpush.bf16.msra.mxu0 0
  %452 = vmatpush.bf16.msra.mxu0 0
  %453 = vmatpush.bf16.msra.mxu0 0
  %454 = vmatpush.bf16.msra.mxu0 0
  %455 = vmatpush.bf16.msra.mxu0 0
  %456 = vmatpush.bf16.msra.mxu0 0
  %457 = vmatpush.bf16.msra.mxu0 %v319
  %458 = vmatpush.bf16.msra.mxu0 %v318
  %459 = vmatmul.bf16.gmra.mxu0 %v449
  %v460 = vpop.f32.mrf.mxu0
  %v461 = vadd.f32 0.0, %v460
  %v462 = vpop.f32.mrf.mxu0
  %v463 = vadd.f32 0.0, %v462
  %464 = vdwg.mxu0
  %v465 = vadd.f32 %v441, %v461
  %v466 = vadd.f32 %v442, %v463
  %v467 = vxor.u32 %v465, 2147483648
  %v468 = vxor.u32 %v466, 2147483648
  %v469 = vmul.f32 %v467, 1.442695
  %v470 = vpow.pop %v469
  %v471 = vmul.f32 %v468, 1.442695
  %v472 = vpow.pop %v471
  %v473 = vadd.f32 %v470, 1.0
  %v474 = vadd.f32 %v472, 1.0
  %v475 = vrcp.pop %v473
  %v476 = vmul.f32 %v473, %v475
  %v477 = vsub.f32 1.0, %v476
  %v478 = vmul.f32 %v475, %v477
  %v479 = vadd.f32 %v475, %v478
  %vm480 = vweird.f32 %v473
  %vm481 = vweird.f32 %v475
  %vm482 = vmor %vm480, %vm481
  %v483 = vsel %vm482, %v475, %v479
  %v484 = vand.u32 2147483647, %v473
  %vm485 = vcmp.eq.f32.partialorder %v484, 8.507059e+37
  %v486 = vand.u32 %v473, 2147483648
  %v487 = vor.u32 1.1754944e-38, %v486
  %v488 = vsel %vm485, %v487, %v483
  %v489 = vmul.f32 1.0, %v488
  %v490 = vrcp.pop %v474
  %v491 = vmul.f32 %v474, %v490
  %v492 = vsub.f32 1.0, %v491
  %v493 = vmul.f32 %v490, %v492
  %v494 = vadd.f32 %v490, %v493
  %vm495 = vweird.f32 %v474
  %vm496 = vweird.f32 %v490
  %vm497 = vmor %vm495, %vm496
  %v498 = vsel %vm497, %v490, %v494
  %v499 = vand.u32 2147483647, %v474
  %vm500 = vcmp.eq.f32.partialorder %v499, 8.507059e+37
  %v501 = vand.u32 %v474, 2147483648
  %v502 = vor.u32 1.1754944e-38, %v501
  %v503 = vsel %vm500, %v502, %v498
  %v504 = vmul.f32 1.0, %v503
  %v505 = vmul.f32 %v489, 2.0
  %v506 = vmul.f32 %v504, 2.0
  %v507 = vsub.f32 %v505, 1.0
  %v508 = vsub.f32 %v506, 1.0
  %v509 = vmul.f32 %v489, %v411
  %v510 = vmul.f32 %v504, %v412
  %513 = vrot.lane.b32.xlu0 %v507, 32
  %v514 = vpop.permute.xlu0 %513
  %515 = vrot.lane.b32.xlu0 %v508, 32
  %v516 = vpop.permute.xlu0 %515
  %v519 = vmul.f32 %v489, %v514
  %v520 = vmul.f32 %v504, %v516
  %523 = vrot.lane.b32.xlu0 %v519, 32
  %v524 = vpop.permute.xlu0 %523
  %525 = vrot.lane.b32.xlu0 %v520, 32
  %v526 = vpop.permute.xlu0 %525
  %v529 = vadd.f32 %v509, %v524
  %v530 = vadd.f32 %v510, %v526
  %v531 = vtanh.pop %v529
  %v532 = vtanh.pop %v530
  %535 = vrot.lane.b32.xlu0 %v531, 32
  %v536 = vpop.permute.xlu0 %535
  %537 = vrot.lane.b32.xlu0 %v532, 32
  %v538 = vpop.permute.xlu0 %537
  %v541 = vmul.f32 %v489, %v536
  %v542 = vmul.f32 %v504, %v538
  %v543 = vpack.c.bf16 %v541, %v541
  %v544 = vpack.c.bf16 %v542, %v542
  %547 = vrot.lane.b32.xlu0 %v543, 64
  %v548 = vpop.permute.xlu0 %547
  %549 = vrot.lane.b32.xlu0 %v544, 64
  %v550 = vpop.permute.xlu0 %549
  %s553 = scalar_lea.vmem [#allocation3], 16
  %554 = vst.msk [vmem:[%s553] sm:$0xf] %vm297, %v548
  %555 = vst.msk [vmem:[%s553 + $0x4] sm:$0xf] %vm297, %v550
  %s556 = scalar_lea.vmem [#allocation2], 24
  %v557 = vld [vmem:[%s556] sm:$0xf]
  %v558 = vld [vmem:[%s556 + $0x4] sm:$0xf]
  %v559 = vunpack.c.l.bf16 %v557
  %v560 = vunpack.c.l.bf16 %v558
  %v561 = vunpack.c.l.b16 %v543
  %v562 = vunpack.c.l.b16 %v544
  %v563 = vpack.c.b16 %v562, %v561
  %564 = vrot.lane.b32.xlu0 %v563, 64
  %v565 = vpop.permute.xlu0 %564
  %v567 = vsel %vm113, %v565, 0
  %569 = vmatpush.bf16.msra.mxu0 0
  %570 = vmatpush.bf16.msra.mxu0 0
  %571 = vmatpush.bf16.msra.mxu0 0
  %572 = vmatpush.bf16.msra.mxu0 0
  %573 = vmatpush.bf16.msra.mxu0 0
  %574 = vmatpush.bf16.msra.mxu0 0
  %575 = vmatpush.bf16.msra.mxu0 %v319
  %576 = vmatpush.bf16.msra.mxu0 %v318
  %577 = vmatmul.bf16.gmra.mxu0 %v567
  %v578 = vpop.f32.mrf.mxu0
  %v579 = vadd.f32 0.0, %v578
  %v580 = vpop.f32.mrf.mxu0
  %v581 = vadd.f32 0.0, %v580
  %582 = vdwg.mxu0
  %v583 = vadd.f32 %v559, %v579
  %v584 = vadd.f32 %v560, %v581
  %v585 = vxor.u32 %v583, 2147483648
  %v586 = vxor.u32 %v584, 2147483648
  %v587 = vmul.f32 %v585, 1.442695
  %v588 = vpow.pop %v587
  %v589 = vmul.f32 %v586, 1.442695
  %v590 = vpow.pop %v589
  %v591 = vadd.f32 %v588, 1.0
  %v592 = vadd.f32 %v590, 1.0
  %v593 = vrcp.pop %v591
  %v594 = vmul.f32 %v591, %v593
  %v595 = vsub.f32 1.0, %v594
  %v596 = vmul.f32 %v593, %v595
  %v597 = vadd.f32 %v593, %v596
  %vm598 = vweird.f32 %v591
  %vm599 = vweird.f32 %v593
  %vm600 = vmor %vm598, %vm599
  %v601 = vsel %vm600, %v593, %v597
  %v602 = vand.u32 2147483647, %v591
  %vm603 = vcmp.eq.f32.partialorder %v602, 8.507059e+37
  %v604 = vand.u32 %v591, 2147483648
  %v605 = vor.u32 1.1754944e-38, %v604
  %v606 = vsel %vm603, %v605, %v601
  %v607 = vmul.f32 1.0, %v606
  %v608 = vrcp.pop %v592
  %v609 = vmul.f32 %v592, %v608
  %v610 = vsub.f32 1.0, %v609
  %v611 = vmul.f32 %v608, %v610
  %v612 = vadd.f32 %v608, %v611
  %vm613 = vweird.f32 %v592
  %vm614 = vweird.f32 %v608
  %vm615 = vmor %vm613, %vm614
  %v616 = vsel %vm615, %v608, %v612
  %v617 = vand.u32 2147483647, %v592
  %vm618 = vcmp.eq.f32.partialorder %v617, 8.507059e+37
  %v619 = vand.u32 %v592, 2147483648
  %v620 = vor.u32 1.1754944e-38, %v619
  %v621 = vsel %vm618, %v620, %v616
  %v622 = vmul.f32 1.0, %v621
  %v623 = vmul.f32 %v607, 2.0
  %v624 = vmul.f32 %v622, 2.0
  %v625 = vsub.f32 %v623, 1.0
  %v626 = vsub.f32 %v624, 1.0
  %v627 = vmul.f32 %v607, %v529
  %v628 = vmul.f32 %v622, %v530
  %631 = vrot.lane.b32.xlu0 %v625, 32
  %v632 = vpop.permute.xlu0 %631
  %633 = vrot.lane.b32.xlu0 %v626, 32
  %v634 = vpop.permute.xlu0 %633
  %v637 = vmul.f32 %v607, %v632
  %v638 = vmul.f32 %v622, %v634
  %641 = vrot.lane.b32.xlu0 %v637, 32
  %v642 = vpop.permute.xlu0 %641
  %643 = vrot.lane.b32.xlu0 %v638, 32
  %v644 = vpop.permute.xlu0 %643
  %v647 = vadd.f32 %v627, %v642
  %v648 = vadd.f32 %v628, %v644
  %v649 = vtanh.pop %v647
  %v650 = vtanh.pop %v648
  %653 = vrot.lane.b32.xlu0 %v649, 32
  %v654 = vpop.permute.xlu0 %653
  %655 = vrot.lane.b32.xlu0 %v650, 32
  %v656 = vpop.permute.xlu0 %655
  %v659 = vmul.f32 %v607, %v654
  %v660 = vmul.f32 %v622, %v656
  %v661 = vpack.c.bf16 %v659, %v659
  %v662 = vpack.c.bf16 %v660, %v660
  %665 = vrot.lane.b32.xlu0 %v661, 64
  %v666 = vpop.permute.xlu0 %665
  %667 = vrot.lane.b32.xlu0 %v662, 64
  %v668 = vpop.permute.xlu0 %667
  %s671 = scalar_lea.vmem [#allocation3], 24
  %672 = vst.msk [vmem:[%s671] sm:$0xf] %vm297, %v666
  %673 = vst.msk [vmem:[%s671 + $0x4] sm:$0xf] %vm297, %v668
  %s674 = scalar_lea.vmem [#allocation2], 32
  %v675 = vld [vmem:[%s674] sm:$0xf]
  %v676 = vld [vmem:[%s674 + $0x4] sm:$0xf]
  %v677 = vunpack.c.l.bf16 %v675
  %v678 = vunpack.c.l.bf16 %v676
  %v679 = vunpack.c.l.b16 %v661
  %v680 = vunpack.c.l.b16 %v662
  %v681 = vpack.c.b16 %v680, %v679
  %682 = vrot.lane.b32.xlu0 %v681, 64
  %v683 = vpop.permute.xlu0 %682
  %v685 = vsel %vm113, %v683, 0
  %687 = vmatpush.bf16.msra.mxu0 0
  %688 = vmatpush.bf16.msra.mxu0 0
  %689 = vmatpush.bf16.msra.mxu0 0
  %690 = vmatpush.bf16.msra.mxu0 0
  %691 = vmatpush.bf16.msra.mxu0 0
  %692 = vmatpush.bf16.msra.mxu0 0
  %693 = vmatpush.bf16.msra.mxu0 %v319
  %694 = vmatpush.bf16.msra.mxu0 %v318
  %695 = vmatmul.bf16.gmra.mxu0 %v685
  %v696 = vpop.f32.mrf.mxu0
  %v697 = vadd.f32 0.0, %v696
  %v698 = vpop.f32.mrf.mxu0
  %v699 = vadd.f32 0.0, %v698
  %700 = vdwg.mxu0
  %v701 = vadd.f32 %v677, %v697
  %v702 = vadd.f32 %v678, %v699
  %v703 = vxor.u32 %v701, 2147483648
  %v704 = vxor.u32 %v702, 2147483648
  %v705 = vmul.f32 %v703, 1.442695
  %v706 = vpow.pop %v705
  %v707 = vmul.f32 %v704, 1.442695
  %v708 = vpow.pop %v707
  %v709 = vadd.f32 %v706, 1.0
  %v710 = vadd.f32 %v708, 1.0
  %v711 = vrcp.pop %v709
  %v712 = vmul.f32 %v709, %v711
  %v713 = vsub.f32 1.0, %v712
  %v714 = vmul.f32 %v711, %v713
  %v715 = vadd.f32 %v711, %v714
  %vm716 = vweird.f32 %v709
  %vm717 = vweird.f32 %v711
  %vm718 = vmor %vm716, %vm717
  %v719 = vsel %vm718, %v711, %v715
  %v720 = vand.u32 2147483647, %v709
  %vm721 = vcmp.eq.f32.partialorder %v720, 8.507059e+37
  %v722 = vand.u32 %v709, 2147483648
  %v723 = vor.u32 1.1754944e-38, %v722
  %v724 = vsel %vm721, %v723, %v719
  %v725 = vmul.f32 1.0, %v724
  %v726 = vrcp.pop %v710
  %v727 = vmul.f32 %v710, %v726
  %v728 = vsub.f32 1.0, %v727
  %v729 = vmul.f32 %v726, %v728
  %v730 = vadd.f32 %v726, %v729
  %vm731 = vweird.f32 %v710
  %vm732 = vweird.f32 %v726
  %vm733 = vmor %vm731, %vm732
  %v734 = vsel %vm733, %v726, %v730
  %v735 = vand.u32 2147483647, %v710
  %vm736 = vcmp.eq.f32.partialorder %v735, 8.507059e+37
  %v737 = vand.u32 %v710, 2147483648
  %v738 = vor.u32 1.1754944e-38, %v737
  %v739 = vsel %vm736, %v738, %v734
  %v740 = vmul.f32 1.0, %v739
  %v741 = vmul.f32 %v725, 2.0
  %v742 = vmul.f32 %v740, 2.0
  %v743 = vsub.f32 %v741, 1.0
  %v744 = vsub.f32 %v742, 1.0
  %v745 = vmul.f32 %v725, %v647
  %v746 = vmul.f32 %v740, %v648
  %749 = vrot.lane.b32.xlu0 %v743, 32
  %v750 = vpop.permute.xlu0 %749
  %751 = vrot.lane.b32.xlu0 %v744, 32
  %v752 = vpop.permute.xlu0 %751
  %v755 = vmul.f32 %v725, %v750
  %v756 = vmul.f32 %v740, %v752
  %759 = vrot.lane.b32.xlu0 %v755, 32
  %v760 = vpop.permute.xlu0 %759
  %761 = vrot.lane.b32.xlu0 %v756, 32
  %v762 = vpop.permute.xlu0 %761
  %v765 = vadd.f32 %v745, %v760
  %v766 = vadd.f32 %v746, %v762
  %v767 = vtanh.pop %v765
  %v768 = vtanh.pop %v766
  %771 = vrot.lane.b32.xlu0 %v767, 32
  %v772 = vpop.permute.xlu0 %771
  %773 = vrot.lane.b32.xlu0 %v768, 32
  %v774 = vpop.permute.xlu0 %773
  %v777 = vmul.f32 %v725, %v772
  %v778 = vmul.f32 %v740, %v774
  %v779 = vpack.c.bf16 %v777, %v777
  %v780 = vpack.c.bf16 %v778, %v778
  %783 = vrot.lane.b32.xlu0 %v779, 64
  %v784 = vpop.permute.xlu0 %783
  %785 = vrot.lane.b32.xlu0 %v780, 64
  %v786 = vpop.permute.xlu0 %785
  %s789 = scalar_lea.vmem [#allocation3], 32
  %790 = vst.msk [vmem:[%s789] sm:$0xf] %vm297, %v784
  %791 = vst.msk [vmem:[%s789 + $0x4] sm:$0xf] %vm297, %v786
  %s792 = scalar_lea.vmem [#allocation2], 40
  %v793 = vld [vmem:[%s792] sm:$0xf]
  %v794 = vld [vmem:[%s792 + $0x4] sm:$0xf]
  %v795 = vunpack.c.l.bf16 %v793
  %v796 = vunpack.c.l.bf16 %v794
  %v797 = vunpack.c.l.b16 %v779
  %v798 = vunpack.c.l.b16 %v780
  %v799 = vpack.c.b16 %v798, %v797
  %800 = vrot.lane.b32.xlu0 %v799, 64
  %v801 = vpop.permute.xlu0 %800
  %v803 = vsel %vm113, %v801, 0
  %805 = vmatpush.bf16.msra.mxu0 0
  %806 = vmatpush.bf16.msra.mxu0 0
  %807 = vmatpush.bf16.msra.mxu0 0
  %808 = vmatpush.bf16.msra.mxu0 0
  %809 = vmatpush.bf16.msra.mxu0 0
  %810 = vmatpush.bf16.msra.mxu0 0
  %811 = vmatpush.bf16.msra.mxu0 %v319
  %812 = vmatpush.bf16.msra.mxu0 %v318
  %813 = vmatmul.bf16.gmra.mxu0 %v803
  %v814 = vpop.f32.mrf.mxu0
  %v815 = vadd.f32 0.0, %v814
  %v816 = vpop.f32.mrf.mxu0
  %v817 = vadd.f32 0.0, %v816
  %818 = vdwg.mxu0
  %v819 = vadd.f32 %v795, %v815
  %v820 = vadd.f32 %v796, %v817
  %v821 = vxor.u32 %v819, 2147483648
  %v822 = vxor.u32 %v820, 2147483648
  %v823 = vmul.f32 %v821, 1.442695
  %v824 = vpow.pop %v823
  %v825 = vmul.f32 %v822, 1.442695
  %v826 = vpow.pop %v825
  %v827 = vadd.f32 %v824, 1.0
  %v828 = vadd.f32 %v826, 1.0
  %v829 = vrcp.pop %v827
  %v830 = vmul.f32 %v827, %v829
  %v831 = vsub.f32 1.0, %v830
  %v832 = vmul.f32 %v829, %v831
  %v833 = vadd.f32 %v829, %v832
  %vm834 = vweird.f32 %v827
  %vm835 = vweird.f32 %v829
  %vm836 = vmor %vm834, %vm835
  %v837 = vsel %vm836, %v829, %v833
  %v838 = vand.u32 2147483647, %v827
  %vm839 = vcmp.eq.f32.partialorder %v838, 8.507059e+37
  %v840 = vand.u32 %v827, 2147483648
  %v841 = vor.u32 1.1754944e-38, %v840
  %v842 = vsel %vm839, %v841, %v837
  %v843 = vmul.f32 1.0, %v842
  %v844 = vrcp.pop %v828
  %v845 = vmul.f32 %v828, %v844
  %v846 = vsub.f32 1.0, %v845
  %v847 = vmul.f32 %v844, %v846
  %v848 = vadd.f32 %v844, %v847
  %vm849 = vweird.f32 %v828
  %vm850 = vweird.f32 %v844
  %vm851 = vmor %vm849, %vm850
  %v852 = vsel %vm851, %v844, %v848
  %v853 = vand.u32 2147483647, %v828
  %vm854 = vcmp.eq.f32.partialorder %v853, 8.507059e+37
  %v855 = vand.u32 %v828, 2147483648
  %v856 = vor.u32 1.1754944e-38, %v855
  %v857 = vsel %vm854, %v856, %v852
  %v858 = vmul.f32 1.0, %v857
  %v859 = vmul.f32 %v843, 2.0
  %v860 = vmul.f32 %v858, 2.0
  %v861 = vsub.f32 %v859, 1.0
  %v862 = vsub.f32 %v860, 1.0
  %v863 = vmul.f32 %v843, %v765
  %v864 = vmul.f32 %v858, %v766
  %867 = vrot.lane.b32.xlu0 %v861, 32
  %v868 = vpop.permute.xlu0 %867
  %869 = vrot.lane.b32.xlu0 %v862, 32
  %v870 = vpop.permute.xlu0 %869
  %v873 = vmul.f32 %v843, %v868
  %v874 = vmul.f32 %v858, %v870
  %877 = vrot.lane.b32.xlu0 %v873, 32
  %v878 = vpop.permute.xlu0 %877
  %879 = vrot.lane.b32.xlu0 %v874, 32
  %v880 = vpop.permute.xlu0 %879
  %v883 = vadd.f32 %v863, %v878
  %v884 = vadd.f32 %v864, %v880
  %v885 = vtanh.pop %v883
  %v886 = vtanh.pop %v884
  %889 = vrot.lane.b32.xlu0 %v885, 32
  %v890 = vpop.permute.xlu0 %889
  %891 = vrot.lane.b32.xlu0 %v886, 32
  %v892 = vpop.permute.xlu0 %891
  %v895 = vmul.f32 %v843, %v890
  %v896 = vmul.f32 %v858, %v892
  %v897 = vpack.c.bf16 %v895, %v895
  %v898 = vpack.c.bf16 %v896, %v896
  %901 = vrot.lane.b32.xlu0 %v897, 64
  %v902 = vpop.permute.xlu0 %901
  %903 = vrot.lane.b32.xlu0 %v898, 64
  %v904 = vpop.permute.xlu0 %903
  %s907 = scalar_lea.vmem [#allocation3], 40
  %908 = vst.msk [vmem:[%s907] sm:$0xf] %vm297, %v902
  %909 = vst.msk [vmem:[%s907 + $0x4] sm:$0xf] %vm297, %v904
  %s910 = scalar_lea.vmem [#allocation2], 48
  %v911 = vld [vmem:[%s910] sm:$0xf]
  %v912 = vld [vmem:[%s910 + $0x4] sm:$0xf]
  %v913 = vunpack.c.l.bf16 %v911
  %v914 = vunpack.c.l.bf16 %v912
  %v915 = vunpack.c.l.b16 %v897
  %v916 = vunpack.c.l.b16 %v898
  %v917 = vpack.c.b16 %v916, %v915
  %918 = vrot.lane.b32.xlu0 %v917, 64
  %v919 = vpop.permute.xlu0 %918
  %v921 = vsel %vm113, %v919, 0
  %923 = vmatpush.bf16.msra.mxu0 0
  %924 = vmatpush.bf16.msra.mxu0 0
  %925 = vmatpush.bf16.msra.mxu0 0
  %926 = vmatpush.bf16.msra.mxu0 0
  %927 = vmatpush.bf16.msra.mxu0 0
  %928 = vmatpush.bf16.msra.mxu0 0
  %929 = vmatpush.bf16.msra.mxu0 %v319
  %930 = vmatpush.bf16.msra.mxu0 %v318
  %931 = vmatmul.bf16.gmra.mxu0 %v921
  %v932 = vpop.f32.mrf.mxu0
  %v933 = vadd.f32 0.0, %v932
  %v934 = vpop.f32.mrf.mxu0
  %v935 = vadd.f32 0.0, %v934
  %936 = vdwg.mxu0
  %v937 = vadd.f32 %v913, %v933
  %v938 = vadd.f32 %v914, %v935
  %v939 = vxor.u32 %v937, 2147483648
  %v940 = vxor.u32 %v938, 2147483648
  %v941 = vmul.f32 %v939, 1.442695
  %v942 = vpow.pop %v941
  %v943 = vmul.f32 %v940, 1.442695
  %v944 = vpow.pop %v943
  %v945 = vadd.f32 %v942, 1.0
  %v946 = vadd.f32 %v944, 1.0
  %v947 = vrcp.pop %v945
  %v948 = vmul.f32 %v945, %v947
  %v949 = vsub.f32 1.0, %v948
  %v950 = vmul.f32 %v947, %v949
  %v951 = vadd.f32 %v947, %v950
  %vm952 = vweird.f32 %v945
  %vm953 = vweird.f32 %v947
  %vm954 = vmor %vm952, %vm953
  %v955 = vsel %vm954, %v947, %v951
  %v956 = vand.u32 2147483647, %v945
  %vm957 = vcmp.eq.f32.partialorder %v956, 8.507059e+37
  %v958 = vand.u32 %v945, 2147483648
  %v959 = vor.u32 1.1754944e-38, %v958
  %v960 = vsel %vm957, %v959, %v955
  %v961 = vmul.f32 1.0, %v960
  %v962 = vrcp.pop %v946
  %v963 = vmul.f32 %v946, %v962
  %v964 = vsub.f32 1.0, %v963
  %v965 = vmul.f32 %v962, %v964
  %v966 = vadd.f32 %v962, %v965
  %vm967 = vweird.f32 %v946
  %vm968 = vweird.f32 %v962
  %vm969 = vmor %vm967, %vm968
  %v970 = vsel %vm969, %v962, %v966
  %v971 = vand.u32 2147483647, %v946
  %vm972 = vcmp.eq.f32.partialorder %v971, 8.507059e+37
  %v973 = vand.u32 %v946, 2147483648
  %v974 = vor.u32 1.1754944e-38, %v973
  %v975 = vsel %vm972, %v974, %v970
  %v976 = vmul.f32 1.0, %v975
  %v977 = vmul.f32 %v961, 2.0
  %v978 = vmul.f32 %v976, 2.0
  %v979 = vsub.f32 %v977, 1.0
  %v980 = vsub.f32 %v978, 1.0
  %v981 = vmul.f32 %v961, %v883
  %v982 = vmul.f32 %v976, %v884
  %985 = vrot.lane.b32.xlu0 %v979, 32
  %v986 = vpop.permute.xlu0 %985
  %987 = vrot.lane.b32.xlu0 %v980, 32
  %v988 = vpop.permute.xlu0 %987
  %v991 = vmul.f32 %v961, %v986
  %v992 = vmul.f32 %v976, %v988
  %995 = vrot.lane.b32.xlu0 %v991, 32
  %v996 = vpop.permute.xlu0 %995
  %997 = vrot.lane.b32.xlu0 %v992, 32
  %v998 = vpop.permute.xlu0 %997
  %v1001 = vadd.f32 %v981, %v996
  %v1002 = vadd.f32 %v982, %v998
  %v1003 = vtanh.pop %v1001
  %v1004 = vtanh.pop %v1002
  %1007 = vrot.lane.b32.xlu0 %v1003, 32
  %v1008 = vpop.permute.xlu0 %1007
  %1009 = vrot.lane.b32.xlu0 %v1004, 32
  %v1010 = vpop.permute.xlu0 %1009
  %v1013 = vmul.f32 %v961, %v1008
  %v1014 = vmul.f32 %v976, %v1010
  %v1015 = vpack.c.bf16 %v1013, %v1013
  %v1016 = vpack.c.bf16 %v1014, %v1014
  %1019 = vrot.lane.b32.xlu0 %v1015, 64
  %v1020 = vpop.permute.xlu0 %1019
  %1021 = vrot.lane.b32.xlu0 %v1016, 64
  %v1022 = vpop.permute.xlu0 %1021
  %s1025 = scalar_lea.vmem [#allocation3], 48
  %1026 = vst.msk [vmem:[%s1025] sm:$0xf] %vm297, %v1020
  %1027 = vst.msk [vmem:[%s1025 + $0x4] sm:$0xf] %vm297, %v1022
  %s1028 = scalar_lea.vmem [#allocation2], 56
  %v1029 = vld [vmem:[%s1028] sm:$0xf]
  %v1030 = vld [vmem:[%s1028 + $0x4] sm:$0xf]
  %v1031 = vunpack.c.l.bf16 %v1029
  %v1032 = vunpack.c.l.bf16 %v1030
  %v1033 = vunpack.c.l.b16 %v1015
  %v1034 = vunpack.c.l.b16 %v1016
  %v1035 = vpack.c.b16 %v1034, %v1033
  %1036 = vrot.lane.b32.xlu0 %v1035, 64
  %v1037 = vpop.permute.xlu0 %1036
  %v1039 = vsel %vm113, %v1037, 0
  %1041 = vmatpush.bf16.msra.mxu0 0
  %1042 = vmatpush.bf16.msra.mxu0 0
  %1043 = vmatpush.bf16.msra.mxu0 0
  %1044 = vmatpush.bf16.msra.mxu0 0
  %1045 = vmatpush.bf16.msra.mxu0 0
  %1046 = vmatpush.bf16.msra.mxu0 0
  %1047 = vmatpush.bf16.msra.mxu0 %v319
  %1048 = vmatpush.bf16.msra.mxu0 %v318
  %1049 = vmatmul.bf16.gmra.mxu0 %v1039
  %v1050 = vpop.f32.mrf.mxu0
  %v1051 = vadd.f32 0.0, %v1050
  %v1052 = vpop.f32.mrf.mxu0
  %v1053 = vadd.f32 0.0, %v1052
  %1054 = vdwg.mxu0
  %v1055 = vadd.f32 %v1031, %v1051
  %v1056 = vadd.f32 %v1032, %v1053
  %v1057 = vxor.u32 %v1055, 2147483648
  %v1058 = vxor.u32 %v1056, 2147483648
  %v1059 = vmul.f32 %v1057, 1.442695
  %v1060 = vpow.pop %v1059
  %v1061 = vmul.f32 %v1058, 1.442695
  %v1062 = vpow.pop %v1061
  %v1063 = vadd.f32 %v1060, 1.0
  %v1064 = vadd.f32 %v1062, 1.0
  %v1065 = vrcp.pop %v1063
  %v1066 = vmul.f32 %v1063, %v1065
  %v1067 = vsub.f32 1.0, %v1066
  %v1068 = vmul.f32 %v1065, %v1067
  %v1069 = vadd.f32 %v1065, %v1068
  %vm1070 = vweird.f32 %v1063
  %vm1071 = vweird.f32 %v1065
  %vm1072 = vmor %vm1070, %vm1071
  %v1073 = vsel %vm1072, %v1065, %v1069
  %v1074 = vand.u32 2147483647, %v1063
  %vm1075 = vcmp.eq.f32.partialorder %v1074, 8.507059e+37
  %v1076 = vand.u32 %v1063, 2147483648
  %v1077 = vor.u32 1.1754944e-38, %v1076
  %v1078 = vsel %vm1075, %v1077, %v1073
  %v1079 = vmul.f32 1.0, %v1078
  %v1080 = vrcp.pop %v1064
  %v1081 = vmul.f32 %v1064, %v1080
  %v1082 = vsub.f32 1.0, %v1081
  %v1083 = vmul.f32 %v1080, %v1082
  %v1084 = vadd.f32 %v1080, %v1083
  %vm1085 = vweird.f32 %v1064
  %vm1086 = vweird.f32 %v1080
  %vm1087 = vmor %vm1085, %vm1086
  %v1088 = vsel %vm1087, %v1080, %v1084
  %v1089 = vand.u32 2147483647, %v1064
  %vm1090 = vcmp.eq.f32.partialorder %v1089, 8.507059e+37
  %v1091 = vand.u32 %v1064, 2147483648
  %v1092 = vor.u32 1.1754944e-38, %v1091
  %v1093 = vsel %vm1090, %v1092, %v1088
  %v1094 = vmul.f32 1.0, %v1093
  %v1095 = vmul.f32 %v1079, 2.0
  %v1096 = vmul.f32 %v1094, 2.0
  %v1097 = vsub.f32 %v1095, 1.0
  %v1098 = vsub.f32 %v1096, 1.0
  %v1099 = vmul.f32 %v1079, %v1001
  %v1100 = vmul.f32 %v1094, %v1002
  %1103 = vrot.lane.b32.xlu0 %v1097, 32
  %v1104 = vpop.permute.xlu0 %1103
  %1105 = vrot.lane.b32.xlu0 %v1098, 32
  %v1106 = vpop.permute.xlu0 %1105
  %v1109 = vmul.f32 %v1079, %v1104
  %v1110 = vmul.f32 %v1094, %v1106
  %1113 = vrot.lane.b32.xlu0 %v1109, 32
  %v1114 = vpop.permute.xlu0 %1113
  %1115 = vrot.lane.b32.xlu0 %v1110, 32
  %v1116 = vpop.permute.xlu0 %1115
  %v1119 = vadd.f32 %v1099, %v1114
  %v1120 = vadd.f32 %v1100, %v1116
  %v1121 = vtanh.pop %v1119
  %v1122 = vtanh.pop %v1120
  %1125 = vrot.lane.b32.xlu0 %v1121, 32
  %v1126 = vpop.permute.xlu0 %1125
  %1127 = vrot.lane.b32.xlu0 %v1122, 32
  %v1128 = vpop.permute.xlu0 %1127
  %v1131 = vmul.f32 %v1079, %v1126
  %v1132 = vmul.f32 %v1094, %v1128
  %v1133 = vpack.c.bf16 %v1131, %v1131
  %v1134 = vpack.c.bf16 %v1132, %v1132
  %1137 = vrot.lane.b32.xlu0 %v1133, 64
  %v1138 = vpop.permute.xlu0 %1137
  %1139 = vrot.lane.b32.xlu0 %v1134, 64
  %v1140 = vpop.permute.xlu0 %1139
  %s1143 = scalar_lea.vmem [#allocation3], 56
  %1144 = vst.msk [vmem:[%s1143] sm:$0xf] %vm297, %v1138
  %1145 = vst.msk [vmem:[%s1143 + $0x4] sm:$0xf] %vm297, %v1140
  %1148 = vrot.lane.b32.xlu0 %v1131, 64
  %v1149 = vpop.permute.xlu0 %1148
  %1150 = vrot.lane.b32.xlu0 %v1132, 64
  %v1151 = vpop.permute.xlu0 %1150
  %1154 = vst.msk [vmem:[#allocation4] sm:$0xff] %vm113, %v1149
  %1155 = vst.msk [vmem:[#allocation4 + $0x8] sm:$0xff] %vm113, %v1151
  %vm1156 = vcmask 523520
  %1157 = vst.msk [vmem:[#allocation4] sm:$0xff] %vm1156, %v1119
  %1158 = vst.msk [vmem:[#allocation4 + $0x8] sm:$0xff] %vm1156, %v1120
  %v1159 = vld [vmem:[%s4] sm:$0xf]
  %v1160 = vld [vmem:[%s4 + $0x4] sm:$0xf]
  %v1161 = vld [vmem:[%s4 + $0x8] sm:$0xf]
  %v1162 = vld [vmem:[%s4 + $0xc] sm:$0xf]
  %v1163 = vld [vmem:[%s5] sm:$0xf]
  %v1164 = vld [vmem:[%s5 + $0x4] sm:$0xf]
  %v1165 = vld [vmem:[%s5 + $0x8] sm:$0xf]
  %v1166 = vld [vmem:[%s5 + $0xc] sm:$0xf]
  %v1167 = vld [vmem:[%s6] sm:$0x1]
  %v1168 = vld [vmem:[#allocation3] sm:$0xf]
  %v1169 = vld [vmem:[#allocation3 + $0x4] sm:$0xf]
  %v1170 = vld [vmem:[#allocation3 + $0x8] sm:$0xf]
  %v1171 = vld [vmem:[#allocation3 + $0xc] sm:$0xf]
  %v1172 = vld [vmem:[#allocation3 + $0x10] sm:$0xf]
  %v1173 = vld [vmem:[#allocation3 + $0x14] sm:$0xf]
  %v1174 = vld [vmem:[#allocation3 + $0x18] sm:$0xf]
  %v1175 = vld [vmem:[#allocation3 + $0x1c] sm:$0xf]
  %v1176 = vld [vmem:[#allocation3 + $0x20] sm:$0xf]
  %v1177 = vld [vmem:[#allocation3 + $0x24] sm:$0xf]
  %v1178 = vld [vmem:[#allocation3 + $0x28] sm:$0xf]
  %v1179 = vld [vmem:[#allocation3 + $0x2c] sm:$0xf]
  %v1180 = vld [vmem:[#allocation3 + $0x30] sm:$0xf]
  %v1181 = vld [vmem:[#allocation3 + $0x34] sm:$0xf]
  %v1182 = vld [vmem:[#allocation3 + $0x38] sm:$0xf]
  %v1183 = vld [vmem:[#allocation3 + $0x3c] sm:$0xf]
  %v1185 = vperm.slane %v1167, 0
  %v1203 = vunpack.c.l.b16 %v1168
  %v1204 = vunpack.c.l.b16 %v1169
  %v1205 = vunpack.c.l.b16 %v1170
  %v1206 = vunpack.c.l.b16 %v1171
  %v1207 = vunpack.c.l.b16 %v1172
  %v1208 = vunpack.c.l.b16 %v1173
  %v1209 = vunpack.c.l.b16 %v1174
  %v1210 = vunpack.c.l.b16 %v1175
  %v1211 = vunpack.c.l.b16 %v1176
  %v1212 = vunpack.c.l.b16 %v1177
  %v1213 = vunpack.c.l.b16 %v1178
  %v1214 = vunpack.c.l.b16 %v1179
  %v1215 = vunpack.c.l.b16 %v1180
  %v1216 = vunpack.c.l.b16 %v1181
  %v1217 = vunpack.c.l.b16 %v1182
  %v1218 = vunpack.c.l.b16 %v1183
  %v1219 = vpack.c.b16 %v1204, %v1203
  %v1220 = vpack.c.b16 %v1206, %v1205
  %v1221 = vpack.c.b16 %v1208, %v1207
  %v1222 = vpack.c.b16 %v1210, %v1209
  %v1223 = vpack.c.b16 %v1212, %v1211
  %v1224 = vpack.c.b16 %v1214, %v1213
  %v1225 = vpack.c.b16 %v1216, %v1215
  %v1226 = vpack.c.b16 %v1218, %v1217
  %v1231 = vunpack.c.l.b16 %v1159
  %v1232 = vunpack.c.l.b16 %v1160
  %v1233 = vunpack.c.l.b16 %v1161
  %v1234 = vunpack.c.l.b16 %v1162
  %v1235 = vpack.c.b16 %v1232, %v1231
  %v1236 = vpack.c.b16 %v1234, %v1233
  %v1240 = vsel %vm113, %v1219, 0
  %v1243 = vsel %vm113, %v1220, 0
  %v1246 = vsel %vm113, %v1221, 0
  %v1249 = vsel %vm113, %v1222, 0
  %v1252 = vsel %vm113, %v1223, 0
  %v1255 = vsel %vm113, %v1224, 0
  %v1258 = vsel %vm113, %v1225, 0
  %v1261 = vsel %vm113, %v1226, 0
  %1263 = vmatpush.bf16.msra.mxu0 0
  %1264 = vmatpush.bf16.msra.mxu0 0
  %1265 = vmatpush.bf16.msra.mxu0 0
  %1266 = vmatpush.bf16.msra.mxu0 0
  %1267 = vmatpush.bf16.msra.mxu0 0
  %1268 = vmatpush.bf16.msra.mxu0 0
  %1269 = vmatpush.bf16.msra.mxu0 %v1236
  %1270 = vmatpush.bf16.msra.mxu0 %v1235
  %1271 = vmatmul.bf16.gmra.mxu0 %v1240
  %v1272 = vpop.f32.mrf.mxu0
  %v1273 = vadd.f32 %v1185, %v1272
  %v1274 = vpop.f32.mrf.mxu0
  %v1275 = vadd.f32 %v1185, %v1274
  %1276 = vmatmul.bf16.gmra.mxu0 %v1243
  %v1277 = vpop.f32.mrf.mxu0
  %v1278 = vadd.f32 %v1185, %v1277
  %v1279 = vpop.f32.mrf.mxu0
  %v1280 = vadd.f32 %v1185, %v1279
  %1281 = vmatmul.bf16.gmra.mxu0 %v1246
  %v1282 = vpop.f32.mrf.mxu0
  %v1283 = vadd.f32 %v1185, %v1282
  %v1284 = vpop.f32.mrf.mxu0
  %v1285 = vadd.f32 %v1185, %v1284
  %1286 = vmatmul.bf16.gmra.mxu0 %v1249
  %v1287 = vpop.f32.mrf.mxu0
  %v1288 = vadd.f32 %v1185, %v1287
  %v1289 = vpop.f32.mrf.mxu0
  %v1290 = vadd.f32 %v1185, %v1289
  %1291 = vmatmul.bf16.gmra.mxu0 %v1252
  %v1292 = vpop.f32.mrf.mxu0
  %v1293 = vadd.f32 %v1185, %v1292
  %v1294 = vpop.f32.mrf.mxu0
  %v1295 = vadd.f32 %v1185, %v1294
  %1296 = vmatmul.bf16.gmra.mxu0 %v1255
  %v1297 = vpop.f32.mrf.mxu0
  %v1298 = vadd.f32 %v1185, %v1297
  %v1299 = vpop.f32.mrf.mxu0
  %v1300 = vadd.f32 %v1185, %v1299
  %1301 = vmatmul.bf16.gmra.mxu0 %v1258
  %v1302 = vpop.f32.mrf.mxu0
  %v1303 = vadd.f32 %v1185, %v1302
  %v1304 = vpop.f32.mrf.mxu0
  %v1305 = vadd.f32 %v1185, %v1304
  %1306 = vmatmul.bf16.gmra.mxu0 %v1261
  %v1307 = vpop.f32.mrf.mxu0
  %v1308 = vadd.f32 %v1185, %v1307
  %v1309 = vpop.f32.mrf.mxu0
  %v1310 = vadd.f32 %v1185, %v1309
  %1311 = vdwg.mxu0
  %v1312 = vpack.c.bf16 %v1273, %v1273
  %v1313 = vpack.c.bf16 %v1275, %v1275
  %v1314 = vpack.c.bf16 %v1278, %v1278
  %v1315 = vpack.c.bf16 %v1280, %v1280
  %v1316 = vpack.c.bf16 %v1283, %v1283
  %v1317 = vpack.c.bf16 %v1285, %v1285
  %v1318 = vpack.c.bf16 %v1288, %v1288
  %v1319 = vpack.c.bf16 %v1290, %v1290
  %v1320 = vpack.c.bf16 %v1293, %v1293
  %v1321 = vpack.c.bf16 %v1295, %v1295
  %v1322 = vpack.c.bf16 %v1298, %v1298
  %v1323 = vpack.c.bf16 %v1300, %v1300
  %v1324 = vpack.c.bf16 %v1303, %v1303
  %v1325 = vpack.c.bf16 %v1305, %v1305
  %v1326 = vpack.c.bf16 %v1308, %v1308
  %v1327 = vpack.c.bf16 %v1310, %v1310
  %1328 = vst [vmem:[#allocation2] sm:$0xf] %v1312
  %1329 = vst [vmem:[#allocation2 + $0x4] sm:$0xf] %v1313
  %1330 = vst [vmem:[#allocation2 + $0x8] sm:$0xf] %v1314
  %1331 = vst [vmem:[#allocation2 + $0xc] sm:$0xf] %v1315
  %1332 = vst [vmem:[#allocation2 + $0x10] sm:$0xf] %v1316
  %1333 = vst [vmem:[#allocation2 + $0x14] sm:$0xf] %v1317
  %1334 = vst [vmem:[#allocation2 + $0x18] sm:$0xf] %v1318
  %1335 = vst [vmem:[#allocation2 + $0x1c] sm:$0xf] %v1319
  %1336 = vst [vmem:[#allocation2 + $0x20] sm:$0xf] %v1320
  %1337 = vst [vmem:[#allocation2 + $0x24] sm:$0xf] %v1321
  %1338 = vst [vmem:[#allocation2 + $0x28] sm:$0xf] %v1322
  %1339 = vst [vmem:[#allocation2 + $0x2c] sm:$0xf] %v1323
  %1340 = vst [vmem:[#allocation2 + $0x30] sm:$0xf] %v1324
  %1341 = vst [vmem:[#allocation2 + $0x34] sm:$0xf] %v1325
  %1342 = vst [vmem:[#allocation2 + $0x38] sm:$0xf] %v1326
  %1343 = vst [vmem:[#allocation2 + $0x3c] sm:$0xf] %v1327
  %v1344 = vld [vmem:[#allocation2] sm:$0xf]
  %v1345 = vld [vmem:[#allocation2 + $0x4] sm:$0xf]
  %v1346 = vunpack.c.l.bf16 %v1344
  %v1347 = vunpack.c.l.bf16 %v1345
  %v1348 = vxor.u32 %v1346, 2147483648
  %v1349 = vxor.u32 %v1347, 2147483648
  %v1350 = vmul.f32 %v1348, 1.442695
  %v1351 = vpow.pop %v1350
  %v1352 = vmul.f32 %v1349, 1.442695
  %v1353 = vpow.pop %v1352
  %v1354 = vadd.f32 %v1351, 1.0
  %v1355 = vadd.f32 %v1353, 1.0
  %v1356 = vrcp.pop %v1354
  %v1357 = vmul.f32 %v1354, %v1356
  %v1358 = vsub.f32 1.0, %v1357
  %v1359 = vmul.f32 %v1356, %v1358
  %v1360 = vadd.f32 %v1356, %v1359
  %vm1361 = vweird.f32 %v1354
  %vm1362 = vweird.f32 %v1356
  %vm1363 = vmor %vm1361, %vm1362
  %v1364 = vsel %vm1363, %v1356, %v1360
  %v1365 = vand.u32 2147483647, %v1354
  %vm1366 = vcmp.eq.f32.partialorder %v1365, 8.507059e+37
  %v1367 = vand.u32 %v1354, 2147483648
  %v1368 = vor.u32 1.1754944e-38, %v1367
  %v1369 = vsel %vm1366, %v1368, %v1364
  %v1370 = vmul.f32 1.0, %v1369
  %v1371 = vrcp.pop %v1355
  %v1372 = vmul.f32 %v1355, %v1371
  %v1373 = vsub.f32 1.0, %v1372
  %v1374 = vmul.f32 %v1371, %v1373
  %v1375 = vadd.f32 %v1371, %v1374
  %vm1376 = vweird.f32 %v1355
  %vm1377 = vweird.f32 %v1371
  %vm1378 = vmor %vm1376, %vm1377
  %v1379 = vsel %vm1378, %v1371, %v1375
  %v1380 = vand.u32 2147483647, %v1355
  %vm1381 = vcmp.eq.f32.partialorder %v1380, 8.507059e+37
  %v1382 = vand.u32 %v1355, 2147483648
  %v1383 = vor.u32 1.1754944e-38, %v1382
  %v1384 = vsel %vm1381, %v1383, %v1379
  %v1385 = vmul.f32 1.0, %v1384
  %v1386 = vmul.f32 %v1370, 2.0
  %v1387 = vmul.f32 %v1385, 2.0
  %v1388 = vsub.f32 %v1386, 1.0
  %v1389 = vsub.f32 %v1387, 1.0
  %1392 = vrot.lane.b32.xlu0 %v1388, 32
  %v1393 = vpop.permute.xlu0 %1392
  %1394 = vrot.lane.b32.xlu0 %v1389, 32
  %v1395 = vpop.permute.xlu0 %1394
  %v1398 = vmul.f32 %v1370, %v1393
  %v1399 = vmul.f32 %v1385, %v1395
  %v1400 = vtanh.pop %v1398
  %v1401 = vtanh.pop %v1399
  %1404 = vrot.lane.b32.xlu0 %v1400, 64
  %v1405 = vpop.permute.xlu0 %1404
  %1406 = vrot.lane.b32.xlu0 %v1401, 64
  %v1407 = vpop.permute.xlu0 %1406
  %v1410 = vmul.f32 %v1370, %v1405
  %v1411 = vmul.f32 %v1385, %v1407
  %v1412 = vld [vmem:[%s300] sm:$0xf]
  %v1413 = vld [vmem:[%s300 + $0x4] sm:$0xf]
  %v1414 = vunpack.c.l.bf16 %v1412
  %v1415 = vunpack.c.l.bf16 %v1413
  %v1416 = vpack.c.bf16 %v1411, %v1410
  %1418 = vrot.lane.b32.xlu0 %v1416, 64
  %v1419 = vpop.permute.xlu0 %1418
  %v1424 = vunpack.c.l.b16 %v1163
  %v1425 = vunpack.c.l.b16 %v1164
  %v1426 = vunpack.c.l.b16 %v1165
  %v1427 = vunpack.c.l.b16 %v1166
  %v1428 = vpack.c.b16 %v1425, %v1424
  %v1429 = vpack.c.b16 %v1427, %v1426
  %v1433 = vsel %vm113, %v1419, 0
  %1435 = vmatpush.bf16.msra.mxu0 0
  %1436 = vmatpush.bf16.msra.mxu0 0
  %1437 = vmatpush.bf16.msra.mxu0 0
  %1438 = vmatpush.bf16.msra.mxu0 0
  %1439 = vmatpush.bf16.msra.mxu0 0
  %1440 = vmatpush.bf16.msra.mxu0 0
  %1441 = vmatpush.bf16.msra.mxu0 %v1429
  %1442 = vmatpush.bf16.msra.mxu0 %v1428
  %1443 = vmatmul.bf16.gmra.mxu0 %v1433
  %v1444 = vpop.f32.mrf.mxu0
  %v1445 = vadd.f32 0.0, %v1444
  %v1446 = vpop.f32.mrf.mxu0
  %v1447 = vadd.f32 0.0, %v1446
  %1448 = vdwg.mxu0
  %v1449 = vadd.f32 %v1414, %v1445
  %v1450 = vadd.f32 %v1415, %v1447
  %v1451 = vxor.u32 %v1449, 2147483648
  %v1452 = vxor.u32 %v1450, 2147483648
  %v1453 = vmul.f32 %v1451, 1.442695
  %v1454 = vpow.pop %v1453
  %v1455 = vmul.f32 %v1452, 1.442695
  %v1456 = vpow.pop %v1455
  %v1457 = vadd.f32 %v1454, 1.0
  %v1458 = vadd.f32 %v1456, 1.0
  %v1459 = vrcp.pop %v1457
  %v1460 = vmul.f32 %v1457, %v1459
  %v1461 = vsub.f32 1.0, %v1460
  %v1462 = vmul.f32 %v1459, %v1461
  %v1463 = vadd.f32 %v1459, %v1462
  %vm1464 = vweird.f32 %v1457
  %vm1465 = vweird.f32 %v1459
  %vm1466 = vmor %vm1464, %vm1465
  %v1467 = vsel %vm1466, %v1459, %v1463
  %v1468 = vand.u32 2147483647, %v1457
  %vm1469 = vcmp.eq.f32.partialorder %v1468, 8.507059e+37
  %v1470 = vand.u32 %v1457, 2147483648
  %v1471 = vor.u32 1.1754944e-38, %v1470
  %v1472 = vsel %vm1469, %v1471, %v1467
  %v1473 = vmul.f32 1.0, %v1472
  %v1474 = vrcp.pop %v1458
  %v1475 = vmul.f32 %v1458, %v1474
  %v1476 = vsub.f32 1.0, %v1475
  %v1477 = vmul.f32 %v1474, %v1476
  %v1478 = vadd.f32 %v1474, %v1477
  %vm1479 = vweird.f32 %v1458
  %vm1480 = vweird.f32 %v1474
  %vm1481 = vmor %vm1479, %vm1480
  %v1482 = vsel %vm1481, %v1474, %v1478
  %v1483 = vand.u32 2147483647, %v1458
  %vm1484 = vcmp.eq.f32.partialorder %v1483, 8.507059e+37
  %v1485 = vand.u32 %v1458, 2147483648
  %v1486 = vor.u32 1.1754944e-38, %v1485
  %v1487 = vsel %vm1484, %v1486, %v1482
  %v1488 = vmul.f32 1.0, %v1487
  %v1489 = vmul.f32 %v1473, 2.0
  %v1490 = vmul.f32 %v1488, 2.0
  %v1491 = vsub.f32 %v1489, 1.0
  %v1492 = vsub.f32 %v1490, 1.0
  %1495 = vrot.lane.b32.xlu0 %v1398, 32
  %v1496 = vpop.permute.xlu0 %1495
  %1497 = vrot.lane.b32.xlu0 %v1399, 32
  %v1498 = vpop.permute.xlu0 %1497
  %v1501 = vmul.f32 %v1473, %v1496
  %v1502 = vmul.f32 %v1488, %v1498
  %1505 = vrot.lane.b32.xlu0 %v1491, 32
  %v1506 = vpop.permute.xlu0 %1505
  %1507 = vrot.lane.b32.xlu0 %v1492, 32
  %v1508 = vpop.permute.xlu0 %1507
  %v1511 = vmul.f32 %v1473, %v1506
  %v1512 = vmul.f32 %v1488, %v1508
  %1515 = vrot.lane.b32.xlu0 %v1511, 32
  %v1516 = vpop.permute.xlu0 %1515
  %1517 = vrot.lane.b32.xlu0 %v1512, 32
  %v1518 = vpop.permute.xlu0 %1517
  %v1521 = vadd.f32 %v1501, %v1516
  %v1522 = vadd.f32 %v1502, %v1518
  %v1523 = vtanh.pop %v1521
  %v1524 = vtanh.pop %v1522
  %1527 = vrot.lane.b32.xlu0 %v1523, 32
  %v1528 = vpop.permute.xlu0 %1527
  %1529 = vrot.lane.b32.xlu0 %v1524, 32
  %v1530 = vpop.permute.xlu0 %1529
  %v1533 = vmul.f32 %v1473, %v1528
  %v1534 = vmul.f32 %v1488, %v1530
  %v1535 = vld [vmem:[%s438] sm:$0xf]
  %v1536 = vld [vmem:[%s438 + $0x4] sm:$0xf]
  %v1537 = vunpack.c.l.bf16 %v1535
  %v1538 = vunpack.c.l.bf16 %v1536
  %v1539 = vpack.c.bf16 %v1534, %v1533
  %1541 = vrot.lane.b32.xlu0 %v1539, 64
  %v1542 = vpop.permute.xlu0 %1541
  %v1544 = vsel %vm113, %v1542, 0
  %1546 = vmatpush.bf16.msra.mxu0 0
  %1547 = vmatpush.bf16.msra.mxu0 0
  %1548 = vmatpush.bf16.msra.mxu0 0
  %1549 = vmatpush.bf16.msra.mxu0 0
  %1550 = vmatpush.bf16.msra.mxu0 0
  %1551 = vmatpush.bf16.msra.mxu0 0
  %1552 = vmatpush.bf16.msra.mxu0 %v1429
  %1553 = vmatpush.bf16.msra.mxu0 %v1428
  %1554 = vmatmul.bf16.gmra.mxu0 %v1544
  %v1555 = vpop.f32.mrf.mxu0
  %v1556 = vadd.f32 0.0, %v1555
  %v1557 = vpop.f32.mrf.mxu0
  %v1558 = vadd.f32 0.0, %v1557
  %1559 = vdwg.mxu0
  %v1560 = vadd.f32 %v1537, %v1556
  %v1561 = vadd.f32 %v1538, %v1558
  %v1562 = vxor.u32 %v1560, 2147483648
  %v1563 = vxor.u32 %v1561, 2147483648
  %v1564 = vmul.f32 %v1562, 1.442695
  %v1565 = vpow.pop %v1564
  %v1566 = vmul.f32 %v1563, 1.442695
  %v1567 = vpow.pop %v1566
  %v1568 = vadd.f32 %v1565, 1.0
  %v1569 = vadd.f32 %v1567, 1.0
  %v1570 = vrcp.pop %v1568
  %v1571 = vmul.f32 %v1568, %v1570
  %v1572 = vsub.f32 1.0, %v1571
  %v1573 = vmul.f32 %v1570, %v1572
  %v1574 = vadd.f32 %v1570, %v1573
  %vm1575 = vweird.f32 %v1568
  %vm1576 = vweird.f32 %v1570
  %vm1577 = vmor %vm1575, %vm1576
  %v1578 = vsel %vm1577, %v1570, %v1574
  %v1579 = vand.u32 2147483647, %v1568
  %vm1580 = vcmp.eq.f32.partialorder %v1579, 8.507059e+37
  %v1581 = vand.u32 %v1568, 2147483648
  %v1582 = vor.u32 1.1754944e-38, %v1581
  %v1583 = vsel %vm1580, %v1582, %v1578
  %v1584 = vmul.f32 1.0, %v1583
  %v1585 = vrcp.pop %v1569
  %v1586 = vmul.f32 %v1569, %v1585
  %v1587 = vsub.f32 1.0, %v1586
  %v1588 = vmul.f32 %v1585, %v1587
  %v1589 = vadd.f32 %v1585, %v1588
  %vm1590 = vweird.f32 %v1569
  %vm1591 = vweird.f32 %v1585
  %vm1592 = vmor %vm1590, %vm1591
  %v1593 = vsel %vm1592, %v1585, %v1589
  %v1594 = vand.u32 2147483647, %v1569
  %vm1595 = vcmp.eq.f32.partialorder %v1594, 8.507059e+37
  %v1596 = vand.u32 %v1569, 2147483648
  %v1597 = vor.u32 1.1754944e-38, %v1596
  %v1598 = vsel %vm1595, %v1597, %v1593
  %v1599 = vmul.f32 1.0, %v1598
  %v1600 = vmul.f32 %v1584, 2.0
  %v1601 = vmul.f32 %v1599, 2.0
  %v1602 = vsub.f32 %v1600, 1.0
  %v1603 = vsub.f32 %v1601, 1.0
  %v1604 = vmul.f32 %v1584, %v1521
  %v1605 = vmul.f32 %v1599, %v1522
  %1608 = vrot.lane.b32.xlu0 %v1602, 32
  %v1609 = vpop.permute.xlu0 %1608
  %1610 = vrot.lane.b32.xlu0 %v1603, 32
  %v1611 = vpop.permute.xlu0 %1610
  %v1614 = vmul.f32 %v1584, %v1609
  %v1615 = vmul.f32 %v1599, %v1611
  %1618 = vrot.lane.b32.xlu0 %v1614, 32
  %v1619 = vpop.permute.xlu0 %1618
  %1620 = vrot.lane.b32.xlu0 %v1615, 32
  %v1621 = vpop.permute.xlu0 %1620
  %v1624 = vadd.f32 %v1604, %v1619
  %v1625 = vadd.f32 %v1605, %v1621
  %v1626 = vtanh.pop %v1624
  %v1627 = vtanh.pop %v1625
  %1630 = vrot.lane.b32.xlu0 %v1626, 32
  %v1631 = vpop.permute.xlu0 %1630
  %1632 = vrot.lane.b32.xlu0 %v1627, 32
  %v1633 = vpop.permute.xlu0 %1632
  %v1636 = vmul.f32 %v1584, %v1631
  %v1637 = vmul.f32 %v1599, %v1633
  %v1638 = vld [vmem:[%s556] sm:$0xf]
  %v1639 = vld [vmem:[%s556 + $0x4] sm:$0xf]
  %v1640 = vunpack.c.l.bf16 %v1638
  %v1641 = vunpack.c.l.bf16 %v1639
  %v1642 = vpack.c.bf16 %v1637, %v1636
  %1644 = vrot.lane.b32.xlu0 %v1642, 64
  %v1645 = vpop.permute.xlu0 %1644
  %v1647 = vsel %vm113, %v1645, 0
  %1649 = vmatpush.bf16.msra.mxu0 0
  %1650 = vmatpush.bf16.msra.mxu0 0
  %1651 = vmatpush.bf16.msra.mxu0 0
  %1652 = vmatpush.bf16.msra.mxu0 0
  %1653 = vmatpush.bf16.msra.mxu0 0
  %1654 = vmatpush.bf16.msra.mxu0 0
  %1655 = vmatpush.bf16.msra.mxu0 %v1429
  %1656 = vmatpush.bf16.msra.mxu0 %v1428
  %1657 = vmatmul.bf16.gmra.mxu0 %v1647
  %v1658 = vpop.f32.mrf.mxu0
  %v1659 = vadd.f32 0.0, %v1658
  %v1660 = vpop.f32.mrf.mxu0
  %v1661 = vadd.f32 0.0, %v1660
  %1662 = vdwg.mxu0
  %v1663 = vadd.f32 %v1640, %v1659
  %v1664 = vadd.f32 %v1641, %v1661
  %v1665 = vxor.u32 %v1663, 2147483648
  %v1666 = vxor.u32 %v1664, 2147483648
  %v1667 = vmul.f32 %v1665, 1.442695
  %v1668 = vpow.pop %v1667
  %v1669 = vmul.f32 %v1666, 1.442695
  %v1670 = vpow.pop %v1669
  %v1671 = vadd.f32 %v1668, 1.0
  %v1672 = vadd.f32 %v1670, 1.0
  %v1673 = vrcp.pop %v1671
  %v1674 = vmul.f32 %v1671, %v1673
  %v1675 = vsub.f32 1.0, %v1674
  %v1676 = vmul.f32 %v1673, %v1675
  %v1677 = vadd.f32 %v1673, %v1676
  %vm1678 = vweird.f32 %v1671
  %vm1679 = vweird.f32 %v1673
  %vm1680 = vmor %vm1678, %vm1679
  %v1681 = vsel %vm1680, %v1673, %v1677
  %v1682 = vand.u32 2147483647, %v1671
  %vm1683 = vcmp.eq.f32.partialorder %v1682, 8.507059e+37
  %v1684 = vand.u32 %v1671, 2147483648
  %v1685 = vor.u32 1.1754944e-38, %v1684
  %v1686 = vsel %vm1683, %v1685, %v1681
  %v1687 = vmul.f32 1.0, %v1686
  %v1688 = vrcp.pop %v1672
  %v1689 = vmul.f32 %v1672, %v1688
  %v1690 = vsub.f32 1.0, %v1689
  %v1691 = vmul.f32 %v1688, %v1690
  %v1692 = vadd.f32 %v1688, %v1691
  %vm1693 = vweird.f32 %v1672
  %vm1694 = vweird.f32 %v1688
  %vm1695 = vmor %vm1693, %vm1694
  %v1696 = vsel %vm1695, %v1688, %v1692
  %v1697 = vand.u32 2147483647, %v1672
  %vm1698 = vcmp.eq.f32.partialorder %v1697, 8.507059e+37
  %v1699 = vand.u32 %v1672, 2147483648
  %v1700 = vor.u32 1.1754944e-38, %v1699
  %v1701 = vsel %vm1698, %v1700, %v1696
  %v1702 = vmul.f32 1.0, %v1701
  %v1703 = vmul.f32 %v1687, 2.0
  %v1704 = vmul.f32 %v1702, 2.0
  %v1705 = vsub.f32 %v1703, 1.0
  %v1706 = vsub.f32 %v1704, 1.0
  %v1707 = vmul.f32 %v1687, %v1624
  %v1708 = vmul.f32 %v1702, %v1625
  %1711 = vrot.lane.b32.xlu0 %v1705, 32
  %v1712 = vpop.permute.xlu0 %1711
  %1713 = vrot.lane.b32.xlu0 %v1706, 32
  %v1714 = vpop.permute.xlu0 %1713
  %v1717 = vmul.f32 %v1687, %v1712
  %v1718 = vmul.f32 %v1702, %v1714
  %1721 = vrot.lane.b32.xlu0 %v1717, 32
  %v1722 = vpop.permute.xlu0 %1721
  %1723 = vrot.lane.b32.xlu0 %v1718, 32
  %v1724 = vpop.permute.xlu0 %1723
  %v1727 = vadd.f32 %v1707, %v1722
  %v1728 = vadd.f32 %v1708, %v1724
  %v1729 = vtanh.pop %v1727
  %v1730 = vtanh.pop %v1728
  %1733 = vrot.lane.b32.xlu0 %v1729, 32
  %v1734 = vpop.permute.xlu0 %1733
  %1735 = vrot.lane.b32.xlu0 %v1730, 32
  %v1736 = vpop.permute.xlu0 %1735
  %v1739 = vmul.f32 %v1687, %v1734
  %v1740 = vmul.f32 %v1702, %v1736
  %v1741 = vld [vmem:[%s674] sm:$0xf]
  %v1742 = vld [vmem:[%s674 + $0x4] sm:$0xf]
  %v1743 = vunpack.c.l.bf16 %v1741
  %v1744 = vunpack.c.l.bf16 %v1742
  %v1745 = vpack.c.bf16 %v1740, %v1739
  %1747 = vrot.lane.b32.xlu0 %v1745, 64
  %v1748 = vpop.permute.xlu0 %1747
  %v1750 = vsel %vm113, %v1748, 0
  %1752 = vmatpush.bf16.msra.mxu0 0
  %1753 = vmatpush.bf16.msra.mxu0 0
  %1754 = vmatpush.bf16.msra.mxu0 0
  %1755 = vmatpush.bf16.msra.mxu0 0
  %1756 = vmatpush.bf16.msra.mxu0 0
  %1757 = vmatpush.bf16.msra.mxu0 0
  %1758 = vmatpush.bf16.msra.mxu0 %v1429
  %1759 = vmatpush.bf16.msra.mxu0 %v1428
  %1760 = vmatmul.bf16.gmra.mxu0 %v1750
  %v1761 = vpop.f32.mrf.mxu0
  %v1762 = vadd.f32 0.0, %v1761
  %v1763 = vpop.f32.mrf.mxu0
  %v1764 = vadd.f32 0.0, %v1763
  %1765 = vdwg.mxu0
  %v1766 = vadd.f32 %v1743, %v1762
  %v1767 = vadd.f32 %v1744, %v1764
  %v1768 = vxor.u32 %v1766, 2147483648
  %v1769 = vxor.u32 %v1767, 2147483648
  %v1770 = vmul.f32 %v1768, 1.442695
  %v1771 = vpow.pop %v1770
  %v1772 = vmul.f32 %v1769, 1.442695
  %v1773 = vpow.pop %v1772
  %v1774 = vadd.f32 %v1771, 1.0
  %v1775 = vadd.f32 %v1773, 1.0
  %v1776 = vrcp.pop %v1774
  %v1777 = vmul.f32 %v1774, %v1776
  %v1778 = vsub.f32 1.0, %v1777
  %v1779 = vmul.f32 %v1776, %v1778
  %v1780 = vadd.f32 %v1776, %v1779
  %vm1781 = vweird.f32 %v1774
  %vm1782 = vweird.f32 %v1776
  %vm1783 = vmor %vm1781, %vm1782
  %v1784 = vsel %vm1783, %v1776, %v1780
  %v1785 = vand.u32 2147483647, %v1774
  %vm1786 = vcmp.eq.f32.partialorder %v1785, 8.507059e+37
  %v1787 = vand.u32 %v1774, 2147483648
  %v1788 = vor.u32 1.1754944e-38, %v1787
  %v1789 = vsel %vm1786, %v1788, %v1784
  %v1790 = vmul.f32 1.0, %v1789
  %v1791 = vrcp.pop %v1775
  %v1792 = vmul.f32 %v1775, %v1791
  %v1793 = vsub.f32 1.0, %v1792
  %v1794 = vmul.f32 %v1791, %v1793
  %v1795 = vadd.f32 %v1791, %v1794
  %vm1796 = vweird.f32 %v1775
  %vm1797 = vweird.f32 %v1791
  %vm1798 = vmor %vm1796, %vm1797
  %v1799 = vsel %vm1798, %v1791, %v1795
  %v1800 = vand.u32 2147483647, %v1775
  %vm1801 = vcmp.eq.f32.partialorder %v1800, 8.507059e+37
  %v1802 = vand.u32 %v1775, 2147483648
  %v1803 = vor.u32 1.1754944e-38, %v1802
  %v1804 = vsel %vm1801, %v1803, %v1799
  %v1805 = vmul.f32 1.0, %v1804
  %v1806 = vmul.f32 %v1790, 2.0
  %v1807 = vmul.f32 %v1805, 2.0
  %v1808 = vsub.f32 %v1806, 1.0
  %v1809 = vsub.f32 %v1807, 1.0
  %v1810 = vmul.f32 %v1790, %v1727
  %v1811 = vmul.f32 %v1805, %v1728
  %1814 = vrot.lane.b32.xlu0 %v1808, 32
  %v1815 = vpop.permute.xlu0 %1814
  %1816 = vrot.lane.b32.xlu0 %v1809, 32
  %v1817 = vpop.permute.xlu0 %1816
  %v1820 = vmul.f32 %v1790, %v1815
  %v1821 = vmul.f32 %v1805, %v1817
  %1824 = vrot.lane.b32.xlu0 %v1820, 32
  %v1825 = vpop.permute.xlu0 %1824
  %1826 = vrot.lane.b32.xlu0 %v1821, 32
  %v1827 = vpop.permute.xlu0 %1826
  %v1830 = vadd.f32 %v1810, %v1825
  %v1831 = vadd.f32 %v1811, %v1827
  %v1832 = vtanh.pop %v1830
  %v1833 = vtanh.pop %v1831
  %1836 = vrot.lane.b32.xlu0 %v1832, 32
  %v1837 = vpop.permute.xlu0 %1836
  %1838 = vrot.lane.b32.xlu0 %v1833, 32
  %v1839 = vpop.permute.xlu0 %1838
  %v1842 = vmul.f32 %v1790, %v1837
  %v1843 = vmul.f32 %v1805, %v1839
  %v1844 = vld [vmem:[%s792] sm:$0xf]
  %v1845 = vld [vmem:[%s792 + $0x4] sm:$0xf]
  %v1846 = vunpack.c.l.bf16 %v1844
  %v1847 = vunpack.c.l.bf16 %v1845
  %v1848 = vpack.c.bf16 %v1843, %v1842
  %1850 = vrot.lane.b32.xlu0 %v1848, 64
  %v1851 = vpop.permute.xlu0 %1850
  %v1853 = vsel %vm113, %v1851, 0
  %1855 = vmatpush.bf16.msra.mxu0 0
  %1856 = vmatpush.bf16.msra.mxu0 0
  %1857 = vmatpush.bf16.msra.mxu0 0
  %1858 = vmatpush.bf16.msra.mxu0 0
  %1859 = vmatpush.bf16.msra.mxu0 0
  %1860 = vmatpush.bf16.msra.mxu0 0
  %1861 = vmatpush.bf16.msra.mxu0 %v1429
  %1862 = vmatpush.bf16.msra.mxu0 %v1428
  %1863 = vmatmul.bf16.gmra.mxu0 %v1853
  %v1864 = vpop.f32.mrf.mxu0
  %v1865 = vadd.f32 0.0, %v1864
  %v1866 = vpop.f32.mrf.mxu0
  %v1867 = vadd.f32 0.0, %v1866
  %1868 = vdwg.mxu0
  %v1869 = vadd.f32 %v1846, %v1865
  %v1870 = vadd.f32 %v1847, %v1867
  %v1871 = vxor.u32 %v1869, 2147483648
  %v1872 = vxor.u32 %v1870, 2147483648
  %v1873 = vmul.f32 %v1871, 1.442695
  %v1874 = vpow.pop %v1873
  %v1875 = vmul.f32 %v1872, 1.442695
  %v1876 = vpow.pop %v1875
  %v1877 = vadd.f32 %v1874, 1.0
  %v1878 = vadd.f32 %v1876, 1.0
  %v1879 = vrcp.pop %v1877
  %v1880 = vmul.f32 %v1877, %v1879
  %v1881 = vsub.f32 1.0, %v1880
  %v1882 = vmul.f32 %v1879, %v1881
  %v1883 = vadd.f32 %v1879, %v1882
  %vm1884 = vweird.f32 %v1877
  %vm1885 = vweird.f32 %v1879
  %vm1886 = vmor %vm1884, %vm1885
  %v1887 = vsel %vm1886, %v1879, %v1883
  %v1888 = vand.u32 2147483647, %v1877
  %vm1889 = vcmp.eq.f32.partialorder %v1888, 8.507059e+37
  %v1890 = vand.u32 %v1877, 2147483648
  %v1891 = vor.u32 1.1754944e-38, %v1890
  %v1892 = vsel %vm1889, %v1891, %v1887
  %v1893 = vmul.f32 1.0, %v1892
  %v1894 = vrcp.pop %v1878
  %v1895 = vmul.f32 %v1878, %v1894
  %v1896 = vsub.f32 1.0, %v1895
  %v1897 = vmul.f32 %v1894, %v1896
  %v1898 = vadd.f32 %v1894, %v1897
  %vm1899 = vweird.f32 %v1878
  %vm1900 = vweird.f32 %v1894
  %vm1901 = vmor %vm1899, %vm1900
  %v1902 = vsel %vm1901, %v1894, %v1898
  %v1903 = vand.u32 2147483647, %v1878
  %vm1904 = vcmp.eq.f32.partialorder %v1903, 8.507059e+37
  %v1905 = vand.u32 %v1878, 2147483648
  %v1906 = vor.u32 1.1754944e-38, %v1905
  %v1907 = vsel %vm1904, %v1906, %v1902
  %v1908 = vmul.f32 1.0, %v1907
  %v1909 = vmul.f32 %v1893, 2.0
  %v1910 = vmul.f32 %v1908, 2.0
  %v1911 = vsub.f32 %v1909, 1.0
  %v1912 = vsub.f32 %v1910, 1.0
  %v1913 = vmul.f32 %v1893, %v1830
  %v1914 = vmul.f32 %v1908, %v1831
  %1917 = vrot.lane.b32.xlu0 %v1911, 32
  %v1918 = vpop.permute.xlu0 %1917
  %1919 = vrot.lane.b32.xlu0 %v1912, 32
  %v1920 = vpop.permute.xlu0 %1919
  %v1923 = vmul.f32 %v1893, %v1918
  %v1924 = vmul.f32 %v1908, %v1920
  %1927 = vrot.lane.b32.xlu0 %v1923, 32
  %v1928 = vpop.permute.xlu0 %1927
  %1929 = vrot.lane.b32.xlu0 %v1924, 32
  %v1930 = vpop.permute.xlu0 %1929
  %v1933 = vadd.f32 %v1913, %v1928
  %v1934 = vadd.f32 %v1914, %v1930
  %v1935 = vtanh.pop %v1933
  %v1936 = vtanh.pop %v1934
  %1939 = vrot.lane.b32.xlu0 %v1935, 32
  %v1940 = vpop.permute.xlu0 %1939
  %1941 = vrot.lane.b32.xlu0 %v1936, 32
  %v1942 = vpop.permute.xlu0 %1941
  %v1945 = vmul.f32 %v1893, %v1940
  %v1946 = vmul.f32 %v1908, %v1942
  %v1947 = vld [vmem:[%s910] sm:$0xf]
  %v1948 = vld [vmem:[%s910 + $0x4] sm:$0xf]
  %v1949 = vunpack.c.l.bf16 %v1947
  %v1950 = vunpack.c.l.bf16 %v1948
  %v1951 = vpack.c.bf16 %v1946, %v1945
  %1953 = vrot.lane.b32.xlu0 %v1951, 64
  %v1954 = vpop.permute.xlu0 %1953
  %v1956 = vsel %vm113, %v1954, 0
  %1958 = vmatpush.bf16.msra.mxu0 0
  %1959 = vmatpush.bf16.msra.mxu0 0
  %1960 = vmatpush.bf16.msra.mxu0 0
  %1961 = vmatpush.bf16.msra.mxu0 0
  %1962 = vmatpush.bf16.msra.mxu0 0
  %1963 = vmatpush.bf16.msra.mxu0 0
  %1964 = vmatpush.bf16.msra.mxu0 %v1429
  %1965 = vmatpush.bf16.msra.mxu0 %v1428
  %1966 = vmatmul.bf16.gmra.mxu0 %v1956
  %v1967 = vpop.f32.mrf.mxu0
  %v1968 = vadd.f32 0.0, %v1967
  %v1969 = vpop.f32.mrf.mxu0
  %v1970 = vadd.f32 0.0, %v1969
  %1971 = vdwg.mxu0
  %v1972 = vadd.f32 %v1949, %v1968
  %v1973 = vadd.f32 %v1950, %v1970
  %v1974 = vxor.u32 %v1972, 2147483648
  %v1975 = vxor.u32 %v1973, 2147483648
  %v1976 = vmul.f32 %v1974, 1.442695
  %v1977 = vpow.pop %v1976
  %v1978 = vmul.f32 %v1975, 1.442695
  %v1979 = vpow.pop %v1978
  %v1980 = vadd.f32 %v1977, 1.0
  %v1981 = vadd.f32 %v1979, 1.0
  %v1982 = vrcp.pop %v1980
  %v1983 = vmul.f32 %v1980, %v1982
  %v1984 = vsub.f32 1.0, %v1983
  %v1985 = vmul.f32 %v1982, %v1984
  %v1986 = vadd.f32 %v1982, %v1985
  %vm1987 = vweird.f32 %v1980
  %vm1988 = vweird.f32 %v1982
  %vm1989 = vmor %vm1987, %vm1988
  %v1990 = vsel %vm1989, %v1982, %v1986
  %v1991 = vand.u32 2147483647, %v1980
  %vm1992 = vcmp.eq.f32.partialorder %v1991, 8.507059e+37
  %v1993 = vand.u32 %v1980, 2147483648
  %v1994 = vor.u32 1.1754944e-38, %v1993
  %v1995 = vsel %vm1992, %v1994, %v1990
  %v1996 = vmul.f32 1.0, %v1995
  %v1997 = vrcp.pop %v1981
  %v1998 = vmul.f32 %v1981, %v1997
  %v1999 = vsub.f32 1.0, %v1998
  %v2000 = vmul.f32 %v1997, %v1999
  %v2001 = vadd.f32 %v1997, %v2000
  %vm2002 = vweird.f32 %v1981
  %vm2003 = vweird.f32 %v1997
  %vm2004 = vmor %vm2002, %vm2003
  %v2005 = vsel %vm2004, %v1997, %v2001
  %v2006 = vand.u32 2147483647, %v1981
  %vm2007 = vcmp.eq.f32.partialorder %v2006, 8.507059e+37
  %v2008 = vand.u32 %v1981, 2147483648
  %v2009 = vor.u32 1.1754944e-38, %v2008
  %v2010 = vsel %vm2007, %v2009, %v2005
  %v2011 = vmul.f32 1.0, %v2010
  %v2012 = vmul.f32 %v1996, 2.0
  %v2013 = vmul.f32 %v2011, 2.0
  %v2014 = vsub.f32 %v2012, 1.0
  %v2015 = vsub.f32 %v2013, 1.0
  %v2016 = vmul.f32 %v1996, %v1933
  %v2017 = vmul.f32 %v2011, %v1934
  %2020 = vrot.lane.b32.xlu0 %v2014, 32
  %v2021 = vpop.permute.xlu0 %2020
  %2022 = vrot.lane.b32.xlu0 %v2015, 32
  %v2023 = vpop.permute.xlu0 %2022
  %v2026 = vmul.f32 %v1996, %v2021
  %v2027 = vmul.f32 %v2011, %v2023
  %2030 = vrot.lane.b32.xlu0 %v2026, 32
  %v2031 = vpop.permute.xlu0 %2030
  %2032 = vrot.lane.b32.xlu0 %v2027, 32
  %v2033 = vpop.permute.xlu0 %2032
  %v2036 = vadd.f32 %v2016, %v2031
  %v2037 = vadd.f32 %v2017, %v2033
  %v2038 = vtanh.pop %v2036
  %v2039 = vtanh.pop %v2037
  %2042 = vrot.lane.b32.xlu0 %v2038, 32
  %v2043 = vpop.permute.xlu0 %2042
  %2044 = vrot.lane.b32.xlu0 %v2039, 32
  %v2045 = vpop.permute.xlu0 %2044
  %v2048 = vmul.f32 %v1996, %v2043
  %v2049 = vmul.f32 %v2011, %v2045
  %v2050 = vld [vmem:[%s1028] sm:$0xf]
  %v2051 = vld [vmem:[%s1028 + $0x4] sm:$0xf]
  %v2052 = vunpack.c.l.bf16 %v2050
  %v2053 = vunpack.c.l.bf16 %v2051
  %v2054 = vpack.c.bf16 %v2049, %v2048
  %2056 = vrot.lane.b32.xlu0 %v2054, 64
  %v2057 = vpop.permute.xlu0 %2056
  %v2059 = vsel %vm113, %v2057, 0
  %2061 = vmatpush.bf16.msra.mxu0 0
  %2062 = vmatpush.bf16.msra.mxu0 0
  %2063 = vmatpush.bf16.msra.mxu0 0
  %2064 = vmatpush.bf16.msra.mxu0 0
  %2065 = vmatpush.bf16.msra.mxu0 0
  %2066 = vmatpush.bf16.msra.mxu0 0
  %2067 = vmatpush.bf16.msra.mxu0 %v1429
  %2068 = vmatpush.bf16.msra.mxu0 %v1428
  %2069 = vmatmul.bf16.gmra.mxu0 %v2059
  %v2070 = vpop.f32.mrf.mxu0
  %v2071 = vadd.f32 0.0, %v2070
  %v2072 = vpop.f32.mrf.mxu0
  %v2073 = vadd.f32 0.0, %v2072
  %2074 = vdwg.mxu0
  %v2075 = vadd.f32 %v2052, %v2071
  %v2076 = vadd.f32 %v2053, %v2073
  %v2077 = vxor.u32 %v2075, 2147483648
  %v2078 = vxor.u32 %v2076, 2147483648
  %v2079 = vmul.f32 %v2077, 1.442695
  %v2080 = vpow.pop %v2079
  %v2081 = vmul.f32 %v2078, 1.442695
  %v2082 = vpow.pop %v2081
  %v2083 = vadd.f32 %v2080, 1.0
  %v2084 = vadd.f32 %v2082, 1.0
  %v2085 = vrcp.pop %v2083
  %v2086 = vmul.f32 %v2083, %v2085
  %v2087 = vsub.f32 1.0, %v2086
  %v2088 = vmul.f32 %v2085, %v2087
  %v2089 = vadd.f32 %v2085, %v2088
  %vm2090 = vweird.f32 %v2083
  %vm2091 = vweird.f32 %v2085
  %vm2092 = vmor %vm2090, %vm2091
  %v2093 = vsel %vm2092, %v2085, %v2089
  %v2094 = vand.u32 2147483647, %v2083
  %vm2095 = vcmp.eq.f32.partialorder %v2094, 8.507059e+37
  %v2096 = vand.u32 %v2083, 2147483648
  %v2097 = vor.u32 1.1754944e-38, %v2096
  %v2098 = vsel %vm2095, %v2097, %v2093
  %v2099 = vmul.f32 1.0, %v2098
  %v2100 = vrcp.pop %v2084
  %v2101 = vmul.f32 %v2084, %v2100
  %v2102 = vsub.f32 1.0, %v2101
  %v2103 = vmul.f32 %v2100, %v2102
  %v2104 = vadd.f32 %v2100, %v2103
  %vm2105 = vweird.f32 %v2084
  %vm2106 = vweird.f32 %v2100
  %vm2107 = vmor %vm2105, %vm2106
  %v2108 = vsel %vm2107, %v2100, %v2104
  %v2109 = vand.u32 2147483647, %v2084
  %vm2110 = vcmp.eq.f32.partialorder %v2109, 8.507059e+37
  %v2111 = vand.u32 %v2084, 2147483648
  %v2112 = vor.u32 1.1754944e-38, %v2111
  %v2113 = vsel %vm2110, %v2112, %v2108
  %v2114 = vmul.f32 1.0, %v2113
  %v2115 = vmul.f32 %v2099, 2.0
  %v2116 = vmul.f32 %v2114, 2.0
  %v2117 = vsub.f32 %v2115, 1.0
  %v2118 = vsub.f32 %v2116, 1.0
  %v2119 = vmul.f32 %v2099, %v2036
  %v2120 = vmul.f32 %v2114, %v2037
  %2123 = vrot.lane.b32.xlu0 %v2117, 32
  %v2124 = vpop.permute.xlu0 %2123
  %2125 = vrot.lane.b32.xlu0 %v2118, 32
  %v2126 = vpop.permute.xlu0 %2125
  %v2129 = vmul.f32 %v2099, %v2124
  %v2130 = vmul.f32 %v2114, %v2126
  %2133 = vrot.lane.b32.xlu0 %v2129, 32
  %v2134 = vpop.permute.xlu0 %2133
  %2135 = vrot.lane.b32.xlu0 %v2130, 32
  %v2136 = vpop.permute.xlu0 %2135
  %v2139 = vadd.f32 %v2119, %v2134
  %v2140 = vadd.f32 %v2120, %v2136
  %v2141 = vtanh.pop %v2139
  %v2142 = vtanh.pop %v2140
  %2145 = vrot.lane.b32.xlu0 %v2141, 32
  %v2146 = vpop.permute.xlu0 %2145
  %2147 = vrot.lane.b32.xlu0 %v2142, 32
  %v2148 = vpop.permute.xlu0 %2147
  %v2151 = vmul.f32 %v2099, %v2146
  %v2152 = vmul.f32 %v2114, %v2148
  %vm2153 = vcmask 785920
  %2154 = vst.msk [vmem:[#allocation4] sm:$0xff] %vm2153, %v2151
  %2155 = vst.msk [vmem:[#allocation4 + $0x8] sm:$0xff] %vm2153, %v2152
  %2158 = vrot.lane.b32.xlu0 %v2139, 64
  %v2159 = vpop.permute.xlu0 %2158
  %2160 = vrot.lane.b32.xlu0 %v2140, 64
  %v2161 = vpop.permute.xlu0 %2160
  %vm2164 = vcmask 1048320
  %2165 = vst.msk [vmem:[#allocation4] sm:$0xff] %vm2164, %v2159
  %2166 = vst.msk [vmem:[#allocation4 + $0x8] sm:$0xff] %vm2164, %v2161
  %v2167 = vld [vmem:[#allocation4] sm:$0xff]
  %v2168 = vld [vmem:[#allocation4 + $0x8] sm:$0xff]
  %v2169 = vtanh.pop %v2167
  %v2170 = vtanh.pop %v2168
  %v2171 = vpack.c.bf16 %v2170, %v2169
  %v2172 = vld [vmem:[%s7] sm:$0xf]
  %v2173 = vld [vmem:[%s7 + $0x4] sm:$0xf]
  %v2174 = vld [vmem:[%s7 + $0x8] sm:$0xf]
  %v2175 = vld [vmem:[%s7 + $0xc] sm:$0xf]
  %v2176 = vld [vmem:[%s7 + $0x10] sm:$0xf]
  %v2177 = vld [vmem:[%s7 + $0x14] sm:$0xf]
  %v2178 = vld [vmem:[%s7 + $0x18] sm:$0xf]
  %v2179 = vld [vmem:[%s7 + $0x1c] sm:$0xf]
  %v2180 = vld [vmem:[%s7 + $0x20] sm:$0xf]
  %v2181 = vld [vmem:[%s7 + $0x24] sm:$0xf]
  %v2182 = vld [vmem:[%s7 + $0x28] sm:$0xf]
  %v2183 = vld [vmem:[%s7 + $0x2c] sm:$0xf]
  %v2184 = vld [vmem:[%s7 + $0x30] sm:$0xf]
  %v2185 = vld [vmem:[%s7 + $0x34] sm:$0xf]
  %v2186 = vld [vmem:[%s7 + $0x38] sm:$0xf]
  %v2187 = vld [vmem:[%s7 + $0x3c] sm:$0xf]
  %v2188 = vld [vmem:[%s8] sm:$0x1]
  %v2190 = vperm.slane %v2188, 0
  %v2208 = vunpack.c.l.b16 %v2172
  %v2209 = vunpack.c.l.b16 %v2173
  %v2210 = vunpack.c.l.b16 %v2174
  %v2211 = vunpack.c.l.b16 %v2175
  %v2212 = vunpack.c.l.b16 %v2176
  %v2213 = vunpack.c.l.b16 %v2177
  %v2214 = vunpack.c.l.b16 %v2178
  %v2215 = vunpack.c.l.b16 %v2179
  %v2216 = vunpack.c.l.b16 %v2180
  %v2217 = vunpack.c.l.b16 %v2181
  %v2218 = vunpack.c.l.b16 %v2182
  %v2219 = vunpack.c.l.b16 %v2183
  %v2220 = vunpack.c.l.b16 %v2184
  %v2221 = vunpack.c.l.b16 %v2185
  %v2222 = vunpack.c.l.b16 %v2186
  %v2223 = vunpack.c.l.b16 %v2187
  %v2224 = vpack.c.b16 %v2209, %v2208
  %v2225 = vpack.c.b16 %v2211, %v2210
  %v2226 = vpack.c.b16 %v2213, %v2212
  %v2227 = vpack.c.b16 %v2215, %v2214
  %v2228 = vpack.c.b16 %v2217, %v2216
  %v2229 = vpack.c.b16 %v2219, %v2218
  %v2230 = vpack.c.b16 %v2221, %v2220
  %v2231 = vpack.c.b16 %v2223, %v2222
  %2240 = vmatpush.bf16.msra.mxu0 %v2231
  %2241 = vmatpush.bf16.msra.mxu0 %v2230
  %2242 = vmatpush.bf16.msra.mxu0 %v2229
  %2243 = vmatpush.bf16.msra.mxu0 %v2228
  %2244 = vmatpush.bf16.msra.mxu0 %v2227
  %2245 = vmatpush.bf16.msra.mxu0 %v2226
  %2246 = vmatpush.bf16.msra.mxu0 %v2225
  %2247 = vmatpush.bf16.msra.mxu0 %v2224
  %2248 = vmatmul.bf16.gmra.mxu0 %v2171
  %v2249 = vpop.f32.mrf.mxu0
  %v2250 = vadd.f32 %v2190, %v2249
  %v2251 = vpop.f32.mrf.mxu0
  %v2252 = vadd.f32 %v2190, %v2251
  %2253 = vdwg.mxu0
  %2254 = vst [vmem:[%s9] sm:$0xff] %v2250
  %2255 = vst [vmem:[%s9 + $0x8] sm:$0xff] %v2252
  // Predicated region
  $region38: #{qst_encoder_forward.1} parent=0 // pred_check
    _
  $region39: #{qst_encoder_forward.1} parent=0 // pred_check_branch
    %2257 = sbr.rel (0) target = $region41
  $region40: #{qst_encoder_forward.1} parent=0 // pred_region
    _
  $region41: #{qst_encoder_forward.1} parent=0 // pred_fallthru
    _
  // Predicated region
  $region42: #{qst_encoder_forward.1} parent=0 // pred_check
    _
  $region43: #{qst_encoder_forward.1} parent=0 // pred_check_branch
    %2259 = sbr.rel (0) target = $region45
  $region44: #{qst_encoder_forward.1} parent=0 // pred_region
    _
  $region45: #{qst_encoder_forward.1} parent=0 // pred_fallthru
    _

</llo_original>
